<compile_context>
chip_gen: v6e
topology: v6e:2x2x1
jax: 0.10.0
libtpu: 0.0.40
codegen_flags: <defaults>
</compile_context>

<pallas_src>
import functools

import jax
import jax.numpy as jnp
from jax import lax
from jax.experimental import pallas as pl
from jax.experimental.pallas import tpu as pltpu


def _round_up(x, m):
    return (x + m - 1) // m * m


def basic_block_kernel(x_ref, w1_ref, s1_ref, b1_ref, w2_ref, s2_ref, b2_ref,
                       o_ref, *, H, W, Wp):
    # x_ref : (1, C, L1p) f32   flattened zero-padded image, row r = Y*Wp + X
    # w*_ref: (3, C, 3*C) bf16  per-ky conv weights, rows = kx-major / ci-minor
    # s*/b* : (C, 1) f32        folded BN scale / bias
    # o_ref : (1, C, Mp)  f32   output rows m = y*Wp + x (lane-dense, padded)
    C = x_ref.shape[1]
    L1p = x_ref.shape[2]
    Mp = o_ref.shape[2]
    M = H * Wp
    f32 = jnp.float32

    x = x_ref[0]                                       # (C, L1p) f32

    def mm(w, slab_f32):                               # bf16 MXU, f32 accum
        return jnp.dot(w, slab_f32.astype(jnp.bfloat16),
                       preferred_element_type=f32)

    # ---- conv1: kx shifts as lane rolls (XLU), 3 accumulating K=3C dots ----
    # b1cat[kx*C + c, r] = x[c, r + kx]
    t1 = pltpu.roll(x, shift=L1p - 1, axis=1)
    t2 = pltpu.roll(x, shift=L1p - 2, axis=1)
    b1cat = jnp.concatenate([x, t1, t2], axis=0)       # (3C, L1p) f32

    s_ky0 = b1cat[:, :Mp]
    s_ky1 = pltpu.roll(b1cat, shift=L1p - Wp, axis=1)[:, :Mp]
    s_ky2 = pltpu.roll(b1cat, shift=L1p - 2 * Wp, axis=1)[:, :Mp]

    acc1 = mm(w1_ref[0], s_ky0) + mm(w1_ref[1], s_ky1) + mm(w1_ref[2], s_ky2)

    # Exact f32 residual: center tap (ky=1, kx=1) of conv1 == x at (y+1, x+1).
    residual = s_ky1[C:2 * C, :]                       # (C, Mp) f32

    # bn1 + relu; zero the pad columns x in [W, Wp) and the lane-padding tail
    # (they double as conv2's left/right zero padding in this layout).
    pos = lax.broadcasted_iota(jnp.int32, (1, Mp), 1)
    h = jnp.maximum(acc1 * s1_ref[...] + b1_ref[...], 0.0)
    h = jnp.where(((pos % Wp) < W) & (pos < M), h, 0.0)  # (C, Mp) f32

    # ---- conv2: same structure; top/bottom padding via ky edge masks -------
    u0 = pltpu.roll(h, shift=1, axis=1)                # h[:, m-1]  (kx=0)
    u2 = pltpu.roll(h, shift=Mp - 1, axis=1)           # h[:, m+1]  (kx=2)
    b2cat = jnp.concatenate([u0, h, u2], axis=0)       # (3C, Mp) f32

    r_ky0 = jnp.where(pos >= Wp,
                      pltpu.roll(b2cat, shift=Wp, axis=1), 0.0)       # row y-1
    r_ky2 = jnp.where(pos < M - Wp,
                      pltpu.roll(b2cat, shift=Mp - Wp, axis=1), 0.0)  # row y+1

    acc2 = mm(w2_ref[0], r_ky0) + mm(w2_ref[1], b2cat) + mm(w2_ref[2], r_ky2)

    # bn2 + residual + relu; fully lane-dense store (Mp is a multiple of 128).
    out = jnp.maximum(acc2 * s2_ref[...] + b2_ref[...] + residual, 0.0)
    o_ref[0] = out.astype(o_ref.dtype)


def basic_block_pallas(x_nchw, w1, bn1, w2, bn2, eps=1e-5):
    """x_nchw: (B, C, H, W); w*: (Cout, Cin, 3, 3) OIHW; bn*: (gamma, beta, mean, var)."""
    B, C, H, W = x_nchw.shape
    Cout = w1.shape[0]
    assert Cout == C and w1.shape[1] == C, \
        "downsample=None / stride=1 requires inplanes == planes"

    Wp = W + 2                        # padded width (left pad + right pad cols)
    Hp = H + 2
    L1 = Hp * Wp                      # flattened padded-input rows
    M = H * Wp                        # flattened output rows
    Mp = _round_up(M, 128)            # lane-dense (128-multiple) output width
    L1p = _round_up(L1, 128)          # lane-dense input width

    # --- glue: pad + flatten only (layout stays NCHW-derived, no transposes) -
    xpad = jnp.pad(x_nchw.astype(jnp.float32),
                   ((0, 0), (0, 0), (1, 1), (1, 1)))            # (B,C,Hp,Wp)
    xflat = xpad.reshape(B, C, L1)
    xflat = jnp.pad(xflat, ((0, 0), (0, 0), (0, L1p - L1)))     # (B,C,L1p)

    def fold_w(w):
        # OIHW -> (ky, Cout, kx*Cin) bf16, matching slab rows [kx*C + ci].
        return jnp.transpose(w, (2, 0, 3, 1)).reshape(3, C, 3 * C).astype(
            jnp.bfloat16)

    def fold_bn(p):
        g, b, m, v = p
        s = (g / jnp.sqrt(v + eps)).astype(jnp.float32)
        return s.reshape(C, 1), (b - m * s).astype(jnp.float32).reshape(C, 1)

    w1f, w2f = fold_w(w1), fold_w(w2)
    s1, b1 = fold_bn(bn1)
    s2, b2 = fold_bn(bn2)

    kernel = functools.partial(basic_block_kernel, H=H, W=W, Wp=Wp)

    cost = pl.CostEstimate(
        flops=4 * B * H * W * 9 * C * C,               # 2 convs x 2 flop/MAC
        transcendentals=0,
        bytes_accessed=int(B * C * L1p * 4 + B * C * Mp * 4
                           + 2 * (9 * C * C) * 2 + 4 * C * 4))

    out_flat = pl.pallas_call(
        kernel,
        out_shape=jax.ShapeDtypeStruct((B, C, Mp), x_nchw.dtype),
        grid_spec=pltpu.PrefetchScalarGridSpec(
            num_scalar_prefetch=0,
            grid=(B,),
            in_specs=[
                pl.BlockSpec((1, C, L1p), lambda b: (b, 0, 0)),
                pl.BlockSpec((3, C, 3 * C), lambda b: (0, 0, 0)),
                pl.BlockSpec((C, 1), lambda b: (0, 0)),
                pl.BlockSpec((C, 1), lambda b: (0, 0)),
                pl.BlockSpec((3, C, 3 * C), lambda b: (0, 0, 0)),
                pl.BlockSpec((C, 1), lambda b: (0, 0)),
                pl.BlockSpec((C, 1), lambda b: (0, 0)),
            ],
            out_specs=pl.BlockSpec((1, C, Mp), lambda b: (b, 0, 0)),
        ),
        compiler_params=pltpu.CompilerParams(
            dimension_semantics=("parallel",),
            vmem_limit_bytes=48 * 1024 * 1024),
        cost_estimate=cost,
    )(xflat, w1f, s1, b1, w2f, s2, b2)

    # Drop the lane padding and the 2 pad columns; layout is already NCHW.
    out = out_flat[:, :, :M].reshape(B, C, H, Wp)[:, :, :, :W]
    return out


def basic_block_ref(x, w1, bn1, w2, bn2, eps=1e-5):
    """Pure-JAX NCHW reference (matches the PyTorch forward with eval-mode BN)."""
    def conv(h, w):
        return lax.conv_general_dilated(h, w, (1, 1), ((1, 1), (1, 1)),
                                        dimension_numbers=("NCHW", "OIHW", "NCHW"))

    def bn(h, p):
        g, b, m, v = p
        return g[None, :, None, None] * (h - m[None, :, None, None]) / \
            jnp.sqrt(v[None, :, None, None] + eps) + b[None, :, None, None]

    out = jax.nn.relu(bn(conv(x, w1), bn1))
    out = bn(conv(out, w2), bn2)
    return jax.nn.relu(out + x)


if __name__ == "__main__":
    key = jax.random.PRNGKey(0)
    B, C, H, W = 2, 8, 16, 16   # inplanes == planes, stride=1, downsample=None

    ks = jax.random.split(key, 9)
    x = jax.random.normal(ks[0], (B, C, H, W), jnp.float32)
    w1 = jax.random.normal(ks[1], (C, C, 3, 3), jnp.float32) * 0.1
    w2 = jax.random.normal(ks[2], (C, C, 3, 3), jnp.float32) * 0.1
    bn1 = (jax.random.uniform(ks[3], (C,), minval=0.5, maxval=1.5),
           jax.random.normal(ks[4], (C,)) * 0.1,
           jax.random.normal(ks[5], (C,)) * 0.1,
           jax.random.uniform(ks[6], (C,), minval=0.5, maxval=1.5))
    bn2 = (jax.random.uniform(ks[7], (C,), minval=0.5, maxval=1.5),
           jax.random.normal(ks[8], (C,)) * 0.1,
           jnp.zeros((C,)), jnp.ones((C,)))

    out = jax.block_until_ready(basic_block_pallas(x, w1, bn1, w2, bn2))
    ref = basic_block_ref(x, w1, bn1, w2, bn2)

    assert out.shape == (B, C, H, W)
    # bf16 MXU path (f32 accumulate, f32 residual) vs f32 reference.
    assert jnp.allclose(out, ref, rtol=5e-2, atol=5e-2), \
        f"max err {jnp.max(jnp.abs(out - ref))}"
    print("KERNEL_OK")
</pallas_src>

<mosaic_0001>
module attributes {stable_mosaic.version = 11 : i64} {
  func.func @basic_block_kernel(%arg0: i32, %arg1: memref<1x8x384xf32, #tpu.memory_space<vmem>>, %arg2: memref<3x8x24xbf16, #tpu.memory_space<vmem>>, %arg3: memref<8x1xf32, #tpu.memory_space<vmem>>, %arg4: memref<8x1xf32, #tpu.memory_space<vmem>>, %arg5: memref<3x8x24xbf16, #tpu.memory_space<vmem>>, %arg6: memref<8x1xf32, #tpu.memory_space<vmem>>, %arg7: memref<8x1xf32, #tpu.memory_space<vmem>>, %arg8: memref<1x8x384xf32, #tpu.memory_space<vmem>>) attributes {dimension_semantics = [#tpu.dimension_semantics<parallel>], iteration_bounds = array<i64: 2>, scalar_prefetch = 0 : i64, scratch_operands = 0 : i64, tpu.core_type = #tpu.core_type<tc>, window_params = [{transform_indices = @transform_0, window_bounds = array<i64: 1, 8, 384>}, {pipeline_mode = #tpu.pipeline_mode<synchronous>, transform_indices = @transform_1, window_bounds = array<i64: 3, 8, 24>}, {pipeline_mode = #tpu.pipeline_mode<synchronous>, transform_indices = @transform_2, window_bounds = array<i64: 8, 1>}, {pipeline_mode = #tpu.pipeline_mode<synchronous>, transform_indices = @transform_3, window_bounds = array<i64: 8, 1>}, {pipeline_mode = #tpu.pipeline_mode<synchronous>, transform_indices = @transform_4, window_bounds = array<i64: 3, 8, 24>}, {pipeline_mode = #tpu.pipeline_mode<synchronous>, transform_indices = @transform_5, window_bounds = array<i64: 8, 1>}, {pipeline_mode = #tpu.pipeline_mode<synchronous>, transform_indices = @transform_6, window_bounds = array<i64: 8, 1>}, {transform_indices = @transform_7, window_bounds = array<i64: 1, 8, 384>}]} {
    %c0 = arith.constant 0 : index
    %c0_0 = arith.constant 0 : index
    %c0_1 = arith.constant 0 : index
    %0 = vector.load %arg1[%c0, %c0_0, %c0_1] : memref<1x8x384xf32, #tpu.memory_space<vmem>>, vector<1x8x384xf32>
    %1 = vector.shape_cast %0 : vector<1x8x384xf32> to vector<8x384xf32>
    %c383_i32 = arith.constant 383 : i32
    %2 = tpu.dynamic_rotate %1 by %c383_i32 dim 1 : vector<8x384xf32>, i32 -> vector<8x384xf32>
    %c382_i32 = arith.constant 382 : i32
    %3 = tpu.dynamic_rotate %1 by %c382_i32 dim 1 : vector<8x384xf32>, i32 -> vector<8x384xf32>
    %4 = tpu.concatenate %1, %2, %3 in 0 : vector<8x384xf32>, vector<8x384xf32>, vector<8x384xf32> -> vector<24x384xf32>
    %c366_i32 = arith.constant 366 : i32
    %5 = tpu.dynamic_rotate %4 by %c366_i32 dim 1 : vector<24x384xf32>, i32 -> vector<24x384xf32>
    %c348_i32 = arith.constant 348 : i32
    %6 = tpu.dynamic_rotate %4 by %c348_i32 dim 1 : vector<24x384xf32>, i32 -> vector<24x384xf32>
    %c0_2 = arith.constant 0 : index
    %c0_3 = arith.constant 0 : index
    %c0_4 = arith.constant 0 : index
    %7 = vector.load %arg2[%c0_2, %c0_3, %c0_4] : memref<3x8x24xbf16, #tpu.memory_space<vmem>>, vector<1x8x24xbf16>
    %8 = vector.shape_cast %7 : vector<1x8x24xbf16> to vector<8x24xbf16>
    %9 = arith.truncf %4 : vector<24x384xf32> to vector<24x384xbf16>
    %cst = arith.constant dense<0.000000e+00> : vector<8x384xf32>
    %10 = tpu.matmul %8, %9, %cst {dimension_numbers = #tpu.dot_dimension_numbers<[1], [0], [0], [1], [0, 0, 1, 1], [], []>} : vector<8x24xbf16>, vector<24x384xbf16>, vector<8x384xf32> -> vector<8x384xf32>
    %c1 = arith.constant 1 : index
    %c0_5 = arith.constant 0 : index
    %c0_6 = arith.constant 0 : index
    %11 = vector.load %arg2[%c1, %c0_5, %c0_6] : memref<3x8x24xbf16, #tpu.memory_space<vmem>>, vector<1x8x24xbf16>
    %12 = vector.shape_cast %11 : vector<1x8x24xbf16> to vector<8x24xbf16>
    %13 = arith.truncf %5 : vector<24x384xf32> to vector<24x384xbf16>
    %cst_7 = arith.constant dense<0.000000e+00> : vector<8x384xf32>
    %14 = tpu.matmul %12, %13, %cst_7 {dimension_numbers = #tpu.dot_dimension_numbers<[1], [0], [0], [1], [0, 0, 1, 1], [], []>} : vector<8x24xbf16>, vector<24x384xbf16>, vector<8x384xf32> -> vector<8x384xf32>
    %15 = arith.addf %10, %14 : vector<8x384xf32>
    %c2 = arith.constant 2 : index
    %c0_8 = arith.constant 0 : index
    %c0_9 = arith.constant 0 : index
    %16 = vector.load %arg2[%c2, %c0_8, %c0_9] : memref<3x8x24xbf16, #tpu.memory_space<vmem>>, vector<1x8x24xbf16>
    %17 = vector.shape_cast %16 : vector<1x8x24xbf16> to vector<8x24xbf16>
    %18 = arith.truncf %6 : vector<24x384xf32> to vector<24x384xbf16>
    %cst_10 = arith.constant dense<0.000000e+00> : vector<8x384xf32>
    %19 = tpu.matmul %17, %18, %cst_10 {dimension_numbers = #tpu.dot_dimension_numbers<[1], [0], [0], [1], [0, 0, 1, 1], [], []>} : vector<8x24xbf16>, vector<24x384xbf16>, vector<8x384xf32> -> vector<8x384xf32>
    %20 = arith.addf %15, %19 : vector<8x384xf32>
    %21 = vector.extract_strided_slice %5 {offsets = [8, 0], sizes = [8, 384], strides = [1, 1]} : vector<24x384xf32> to vector<8x384xf32>
    %22 = tpu.iota {dimensions = array<i32: 1>} : vector<1x384xi32>
    %c0_11 = arith.constant 0 : index
    %c0_12 = arith.constant 0 : index
    %23 = vector.load %arg3[%c0_11, %c0_12] : memref<8x1xf32, #tpu.memory_space<vmem>>, vector<8x1xf32>
    %24 = vector.broadcast %23 : vector<8x1xf32> to vector<8x384xf32>
    %25 = arith.mulf %20, %24 : vector<8x384xf32>
    %c0_13 = arith.constant 0 : index
    %c0_14 = arith.constant 0 : index
    %26 = vector.load %arg4[%c0_13, %c0_14] : memref<8x1xf32, #tpu.memory_space<vmem>>, vector<8x1xf32>
    %27 = vector.broadcast %26 : vector<8x1xf32> to vector<8x384xf32>
    %28 = arith.addf %25, %27 : vector<8x384xf32>
    %cst_15 = arith.constant 0.000000e+00 : f32
    %29 = vector.broadcast %cst_15 : f32 to vector<8x384xf32>
    %30 = arith.maximumf %28, %29 : vector<8x384xf32>
    %c18_i32 = arith.constant 18 : i32
    %c0_i32 = arith.constant 0 : i32
    %31 = arith.cmpi eq, %c18_i32, %c0_i32 : i32
    %c1_i32 = arith.constant 1 : i32
    %32 = arith.select %31, %c1_i32, %c18_i32 : i32
    %33 = vector.broadcast %32 : i32 to vector<1x384xi32>
    %34 = arith.remsi %22, %33 : vector<1x384xi32>
    %c0_i32_16 = arith.constant 0 : i32
    %35 = vector.broadcast %c0_i32_16 : i32 to vector<1x384xi32>
    %36 = arith.cmpi ne, %34, %35 : vector<1x384xi32>
    %c0_i32_17 = arith.constant 0 : i32
    %37 = vector.broadcast %c0_i32_17 : i32 to vector<1x384xi32>
    %38 = arith.cmpi slt, %34, %37 : vector<1x384xi32>
    %c0_i32_18 = arith.constant 0 : i32
    %39 = arith.cmpi slt, %32, %c0_i32_18 : i32
    %40 = vector.broadcast %39 : i1 to vector<1x384xi1>
    %41 = vector.broadcast %40 : vector<1x384xi1> to vector<1x384xi1>
    %42 = arith.xori %38, %41 : vector<1x384xi1>
    %43 = arith.andi %42, %36 : vector<1x384xi1>
    %44 = vector.broadcast %32 : i32 to vector<1x384xi32>
    %45 = arith.addi %34, %44 : vector<1x384xi32>
    %46 = arith.select %43, %45, %34 : vector<1x384xi1>, vector<1x384xi32>
    %c16_i32 = arith.constant 16 : i32
    %47 = vector.broadcast %c16_i32 : i32 to vector<1x384xi32>
    %48 = arith.cmpi slt, %46, %47 : vector<1x384xi32>
    %c288_i32 = arith.constant 288 : i32
    %49 = vector.broadcast %c288_i32 : i32 to vector<1x384xi32>
    %50 = arith.cmpi slt, %22, %49 : vector<1x384xi32>
    %51 = arith.andi %48, %50 : vector<1x384xi1>
    %cst_19 = arith.constant 0.000000e+00 : f32
    %52 = vector.shape_cast %51 : vector<1x384xi1> to vector<1x384xi1>
    %53 = vector.broadcast %52 : vector<1x384xi1> to vector<8x384xi1>
    %54 = vector.broadcast %cst_19 : f32 to vector<8x384xf32>
    %55 = arith.select %53, %30, %54 : vector<8x384xi1>, vector<8x384xf32>
    %c1_i32_20 = arith.constant 1 : i32
    %56 = tpu.dynamic_rotate %55 by %c1_i32_20 dim 1 : vector<8x384xf32>, i32 -> vector<8x384xf32>
    %c383_i32_21 = arith.constant 383 : i32
    %57 = tpu.dynamic_rotate %55 by %c383_i32_21 dim 1 : vector<8x384xf32>, i32 -> vector<8x384xf32>
    %58 = tpu.concatenate %56, %55, %57 in 0 : vector<8x384xf32>, vector<8x384xf32>, vector<8x384xf32> -> vector<24x384xf32>
    %c18_i32_22 = arith.constant 18 : i32
    %59 = vector.broadcast %c18_i32_22 : i32 to vector<1x384xi32>
    %60 = arith.cmpi sge, %22, %59 : vector<1x384xi32>
    %c18_i32_23 = arith.constant 18 : i32
    %61 = tpu.dynamic_rotate %58 by %c18_i32_23 dim 1 : vector<24x384xf32>, i32 -> vector<24x384xf32>
    %cst_24 = arith.constant 0.000000e+00 : f32
    %62 = vector.shape_cast %60 : vector<1x384xi1> to vector<1x384xi1>
    %63 = vector.broadcast %62 : vector<1x384xi1> to vector<24x384xi1>
    %64 = vector.broadcast %cst_24 : f32 to vector<24x384xf32>
    %65 = arith.select %63, %61, %64 : vector<24x384xi1>, vector<24x384xf32>
    %c270_i32 = arith.constant 270 : i32
    %66 = vector.broadcast %c270_i32 : i32 to vector<1x384xi32>
    %67 = arith.cmpi slt, %22, %66 : vector<1x384xi32>
    %c366_i32_25 = arith.constant 366 : i32
    %68 = tpu.dynamic_rotate %58 by %c366_i32_25 dim 1 : vector<24x384xf32>, i32 -> vector<24x384xf32>
    %cst_26 = arith.constant 0.000000e+00 : f32
    %69 = vector.shape_cast %67 : vector<1x384xi1> to vector<1x384xi1>
    %70 = vector.broadcast %69 : vector<1x384xi1> to vector<24x384xi1>
    %71 = vector.broadcast %cst_26 : f32 to vector<24x384xf32>
    %72 = arith.select %70, %68, %71 : vector<24x384xi1>, vector<24x384xf32>
    %c0_27 = arith.constant 0 : index
    %c0_28 = arith.constant 0 : index
    %c0_29 = arith.constant 0 : index
    %73 = vector.load %arg5[%c0_27, %c0_28, %c0_29] : memref<3x8x24xbf16, #tpu.memory_space<vmem>>, vector<1x8x24xbf16>
    %74 = vector.shape_cast %73 : vector<1x8x24xbf16> to vector<8x24xbf16>
    %75 = arith.truncf %65 : vector<24x384xf32> to vector<24x384xbf16>
    %cst_30 = arith.constant dense<0.000000e+00> : vector<8x384xf32>
    %76 = tpu.matmul %74, %75, %cst_30 {dimension_numbers = #tpu.dot_dimension_numbers<[1], [0], [0], [1], [0, 0, 1, 1], [], []>} : vector<8x24xbf16>, vector<24x384xbf16>, vector<8x384xf32> -> vector<8x384xf32>
    %c1_31 = arith.constant 1 : index
    %c0_32 = arith.constant 0 : index
    %c0_33 = arith.constant 0 : index
    %77 = vector.load %arg5[%c1_31, %c0_32, %c0_33] : memref<3x8x24xbf16, #tpu.memory_space<vmem>>, vector<1x8x24xbf16>
    %78 = vector.shape_cast %77 : vector<1x8x24xbf16> to vector<8x24xbf16>
    %79 = arith.truncf %58 : vector<24x384xf32> to vector<24x384xbf16>
    %cst_34 = arith.constant dense<0.000000e+00> : vector<8x384xf32>
    %80 = tpu.matmul %78, %79, %cst_34 {dimension_numbers = #tpu.dot_dimension_numbers<[1], [0], [0], [1], [0, 0, 1, 1], [], []>} : vector<8x24xbf16>, vector<24x384xbf16>, vector<8x384xf32> -> vector<8x384xf32>
    %81 = arith.addf %76, %80 : vector<8x384xf32>
    %c2_35 = arith.constant 2 : index
    %c0_36 = arith.constant 0 : index
    %c0_37 = arith.constant 0 : index
    %82 = vector.load %arg5[%c2_35, %c0_36, %c0_37] : memref<3x8x24xbf16, #tpu.memory_space<vmem>>, vector<1x8x24xbf16>
    %83 = vector.shape_cast %82 : vector<1x8x24xbf16> to vector<8x24xbf16>
    %84 = arith.truncf %72 : vector<24x384xf32> to vector<24x384xbf16>
    %cst_38 = arith.constant dense<0.000000e+00> : vector<8x384xf32>
    %85 = tpu.matmul %83, %84, %cst_38 {dimension_numbers = #tpu.dot_dimension_numbers<[1], [0], [0], [1], [0, 0, 1, 1], [], []>} : vector<8x24xbf16>, vector<24x384xbf16>, vector<8x384xf32> -> vector<8x384xf32>
    %86 = arith.addf %81, %85 : vector<8x384xf32>
    %c0_39 = arith.constant 0 : index
    %c0_40 = arith.constant 0 : index
    %87 = vector.load %arg6[%c0_39, %c0_40] : memref<8x1xf32, #tpu.memory_space<vmem>>, vector<8x1xf32>
    %88 = vector.broadcast %87 : vector<8x1xf32> to vector<8x384xf32>
    %89 = arith.mulf %86, %88 : vector<8x384xf32>
    %c0_41 = arith.constant 0 : index
    %c0_42 = arith.constant 0 : index
    %90 = vector.load %arg7[%c0_41, %c0_42] : memref<8x1xf32, #tpu.memory_space<vmem>>, vector<8x1xf32>
    %91 = vector.broadcast %90 : vector<8x1xf32> to vector<8x384xf32>
    %92 = arith.addf %89, %91 : vector<8x384xf32>
    %93 = arith.addf %92, %21 : vector<8x384xf32>
    %cst_43 = arith.constant 0.000000e+00 : f32
    %94 = vector.broadcast %cst_43 : f32 to vector<8x384xf32>
    %95 = arith.maximumf %93, %94 : vector<8x384xf32>
    %c0_44 = arith.constant 0 : index
    %c0_45 = arith.constant 0 : index
    %c0_46 = arith.constant 0 : index
    %96 = vector.load %arg8[%c0_44, %c0_45, %c0_46] : memref<1x8x384xf32, #tpu.memory_space<vmem>>, vector<1x8x384xf32>
    %97 = vector.shape_cast %96 : vector<1x8x384xf32> to vector<8x384xf32>
    %98 = vector.shape_cast %95 : vector<8x384xf32> to vector<1x8x384xf32>
    tpu.vector_store %arg8[%c0_44, %c0_45, %c0_46], %98 {strides = array<i32>} : memref<1x8x384xf32, #tpu.memory_space<vmem>>, vector<1x8x384xf32>,
    return
  }
  func.func @transform_0(%arg0: i32) -> (i32, i32, i32) {
    %c0_i32 = arith.constant 0 : i32
    %c0_i32_0 = arith.constant 0 : i32
    %c0_i32_1 = arith.constant 0 : i32
    return %arg0, %c0_i32, %c0_i32_0 : i32, i32, i32
  }
  func.func @transform_1(%arg0: i32) -> (i32, i32, i32) {
    %c0_i32 = arith.constant 0 : i32
    %c0_i32_0 = arith.constant 0 : i32
    %c0_i32_1 = arith.constant 0 : i32
    %c0_i32_2 = arith.constant 0 : i32
    return %c0_i32, %c0_i32_0, %c0_i32_1 : i32, i32, i32
  }
  func.func @transform_2(%arg0: i32) -> (i32, i32) {
    %c0_i32 = arith.constant 0 : i32
    %c0_i32_0 = arith.constant 0 : i32
    %c0_i32_1 = arith.constant 0 : i32
    return %c0_i32, %c0_i32_0 : i32, i32
  }
  func.func @transform_3(%arg0: i32) -> (i32, i32) {
    %c0_i32 = arith.constant 0 : i32
    %c0_i32_0 = arith.constant 0 : i32
    %c0_i32_1 = arith.constant 0 : i32
    return %c0_i32, %c0_i32_0 : i32, i32
  }
  func.func @transform_4(%arg0: i32) -> (i32, i32, i32) {
    %c0_i32 = arith.constant 0 : i32
    %c0_i32_0 = arith.constant 0 : i32
    %c0_i32_1 = arith.constant 0 : i32
    %c0_i32_2 = arith.constant 0 : i32
    return %c0_i32, %c0_i32_0, %c0_i32_1 : i32, i32, i32
  }
  func.func @transform_5(%arg0: i32) -> (i32, i32) {
    %c0_i32 = arith.constant 0 : i32
    %c0_i32_0 = arith.constant 0 : i32
    %c0_i32_1 = arith.constant 0 : i32
    return %c0_i32, %c0_i32_0 : i32, i32
  }
  func.func @transform_6(%arg0: i32) -> (i32, i32) {
    %c0_i32 = arith.constant 0 : i32
    %c0_i32_0 = arith.constant 0 : i32
    %c0_i32_1 = arith.constant 0 : i32
    return %c0_i32, %c0_i32_0 : i32, i32
  }
  func.func @transform_7(%arg0: i32) -> (i32, i32, i32) {
    %c0_i32 = arith.constant 0 : i32
    %c0_i32_0 = arith.constant 0 : i32
    %c0_i32_1 = arith.constant 0 : i32
    return %arg0, %c0_i32, %c0_i32_0 : i32, i32, i32
  }
}

</mosaic_0001>

<llo_original>
// kernel: tpu_custom_call.1
$region0: #{tpu_custom_call.1}
  #allocation0 [shape = 'u32[]', space=smem, size = 0x4, offset = 0x4, fixed_abs, tag = 'smem constant byte address 0x4 - core index']
  #allocation1 [shape = 'u32[144,128]{1,0:T(1,128)}', space=vmem, size = 0x12000, scoped, tag = 'internal scratch']
  %s0 = inlined_call_operand.hbm [shape: f32[2,8,384], index: 0, kind: input, shape index: {}]
  %s1 = inlined_call_operand.vmem [shape: bf16[3,8,24], index: 1, kind: input, shape index: {}]
  %s2 = inlined_call_operand.vmem [shape: f32[8,1], index: 2, kind: input, shape index: {}]
  %s3 = inlined_call_operand.vmem [shape: f32[8,1], index: 3, kind: input, shape index: {}]
  %s4 = inlined_call_operand.vmem [shape: bf16[3,8,24], index: 4, kind: input, shape index: {}]
  %s5 = inlined_call_operand.vmem [shape: f32[8,1], index: 5, kind: input, shape index: {}]
  %s6 = inlined_call_operand.vmem [shape: f32[8,1], index: 6, kind: input, shape index: {}]
  %s7 = inlined_call_operand.hbm [shape: f32[2,8,384], index: 7, kind: output, shape index: {}]
  %s8 = sld [smem:[#allocation0]]
  $region65: #{tpu_custom_call.1} parent=0
    _
  %s10 = ssub.s32 1, %s8
  %s11 = scalar_select 0, %s10, %s8
  $region1: #{tpu_custom_call.1} parent=0
    #allocation2 [shape = 'u8[24576]{0}', space=vmem, size = 0x6000, scoped, tag = 'input window, operand 0']
    #allocation3 [shape = 's32[2]{0}', space=sflag, size = 0x8, scoped, tag = 'scoped memory for tpu_custom_call.1']
    #allocation4 [shape = 's32[2]{0}', space=sflag, size = 0x8, scoped, tag = 'scoped memory for tpu_custom_call.1']
    #allocation5 [shape = 'u8[24576]{0}', space=vmem, size = 0x6000, scoped, tag = 'output window, operand 0']
    %12 = vsyncpa [#allocation3], 0
    %s13 = scalar_lea.sflag [#allocation3], 1
    %14 = vsyncpa %s13, 0
    %15 = vsyncpa [#allocation4], 0
    %s16 = scalar_lea.sflag [#allocation4], 1
    %17 = vsyncpa %s16, 0
    loop: start=0, step=1, limit=4
    $region2: #{tpu_custom_call.1} parent=1 // loop_pre_header
      _
    $region3: #{tpu_custom_call.1} parent=1 // loop_header
      %s19 = sphi 0, %s23
      %p20 = scmp.ge.s32.totalorder %s19, 4
      %s29 = sphi 0, %s31
      %s32 = sphi 0, %s29
      %s33 = sphi 0, %s32
      %s49 = sphi 0, %s33
      %s53 = sphi 0, %s53
      %s55 = sphi 0, %s53
      %s56 = sphi 0, %s55
      %s70 = sphi 0, %s56
      %s74 = sphi 0, %s74
      %s76 = sphi 0, %s74
      %s77 = sphi 0, %s76
      %s91 = sphi 0, %s77
      %s95 = sphi 0, %s95
      %s97 = sphi 0, %s95
      %s98 = sphi 0, %s97
      %s112 = sphi 0, %s98
      %s116 = sphi 0, %s116
      %s118 = sphi 0, %s116
      %s119 = sphi 0, %s118
      %s133 = sphi 0, %s119
      %s137 = sphi 0, %s137
      %s139 = sphi 0, %s137
      %s140 = sphi 0, %s139
      %s154 = sphi 0, %s140
      %s158 = sphi 0, %s158
      %s160 = sphi 0, %s158
      %s161 = sphi 0, %s160
      %s175 = sphi 0, %s161
      %s181 = sphi 0, %s183
      %s184 = sphi 0, %s181
      %s185 = sphi 0, %s184
      %s201 = sphi 0, %s185
    $region4: #{tpu_custom_call.1} parent=1 // loop_header_branch
      %22 = sbr.rel (%p20) target = $region8
    $region5: #{tpu_custom_call.1} parent=1 // loop_body
      %s24 = ssub.s32 %s19, 1
      %s25 = ssub.s32 %s19, 2
      %s26 = sadd.s32 %s19, 1
      %s27 = ssub.s32 %s19, %s26
      %p28 = scmp.eq.s32.totalorder %s27, 0
      %s30 = sadd.s32 %s29, 1
      %s31 = scalar_select %p28, %s29, %s30
      %p34 = pneg %p28
      %p35 = scmp.eq.s32.totalorder %s19, 1
      %p36 = por %p34, %p35
      %p37 = scmp.ne.s32.totalorder %s29, %s32
      %p38 = scmp.eq.s32.totalorder %s19, 0
      %p39 = por %p37, %p38
      %p40 = scmp.ne.s32.totalorder %s29, %s32
      %p41 = scmp.eq.s32.totalorder %s24, 1
      %p42 = por %p40, %p41
      %p43 = scmp.ne.s32.totalorder %s32, %s33
      %p44 = scmp.eq.s32.totalorder %s24, 0
      %p45 = por %p43, %p44
      %p46 = scmp.ne.s32.totalorder %s32, %s33
      %p47 = scmp.eq.s32.totalorder %s25, 1
      %p48 = por %p46, %p47
      %p50 = scmp.ne.s32.totalorder %s33, %s49
      %p51 = scmp.eq.s32.totalorder %s25, 0
      %p52 = por %p50, %p51
      %s54 = sadd.s32 %s53, 1
      %p57 = scmp.eq.s32.totalorder %s19, 1
      %p58 = scmp.ne.s32.totalorder %s53, %s55
      %p59 = scmp.eq.s32.totalorder %s19, 0
      %p60 = por %p58, %p59
      %p61 = scmp.ne.s32.totalorder %s53, %s55
      %p62 = scmp.eq.s32.totalorder %s24, 1
      %p63 = por %p61, %p62
      %p64 = scmp.ne.s32.totalorder %s55, %s56
      %p65 = scmp.eq.s32.totalorder %s24, 0
      %p66 = por %p64, %p65
      %p67 = scmp.ne.s32.totalorder %s55, %s56
      %p68 = scmp.eq.s32.totalorder %s25, 1
      %p69 = por %p67, %p68
      %p71 = scmp.ne.s32.totalorder %s56, %s70
      %p72 = scmp.eq.s32.totalorder %s25, 0
      %p73 = por %p71, %p72
      %s75 = sadd.s32 %s74, 1
      %p78 = scmp.eq.s32.totalorder %s19, 1
      %p79 = scmp.ne.s32.totalorder %s74, %s76
      %p80 = scmp.eq.s32.totalorder %s19, 0
      %p81 = por %p79, %p80
      %p82 = scmp.ne.s32.totalorder %s74, %s76
      %p83 = scmp.eq.s32.totalorder %s24, 1
      %p84 = por %p82, %p83
      %p85 = scmp.ne.s32.totalorder %s76, %s77
      %p86 = scmp.eq.s32.totalorder %s24, 0
      %p87 = por %p85, %p86
      %p88 = scmp.ne.s32.totalorder %s76, %s77
      %p89 = scmp.eq.s32.totalorder %s25, 1
      %p90 = por %p88, %p89
      %p92 = scmp.ne.s32.totalorder %s77, %s91
      %p93 = scmp.eq.s32.totalorder %s25, 0
      %p94 = por %p92, %p93
      %s96 = sadd.s32 %s95, 1
      %p99 = scmp.eq.s32.totalorder %s19, 1
      %p100 = scmp.ne.s32.totalorder %s95, %s97
      %p101 = scmp.eq.s32.totalorder %s19, 0
      %p102 = por %p100, %p101
      %p103 = scmp.ne.s32.totalorder %s95, %s97
      %p104 = scmp.eq.s32.totalorder %s24, 1
      %p105 = por %p103, %p104
      %p106 = scmp.ne.s32.totalorder %s97, %s98
      %p107 = scmp.eq.s32.totalorder %s24, 0
      %p108 = por %p106, %p107
      %p109 = scmp.ne.s32.totalorder %s97, %s98
      %p110 = scmp.eq.s32.totalorder %s25, 1
      %p111 = por %p109, %p110
      %p113 = scmp.ne.s32.totalorder %s98, %s112
      %p114 = scmp.eq.s32.totalorder %s25, 0
      %p115 = por %p113, %p114
      %s117 = sadd.s32 %s116, 1
      %p120 = scmp.eq.s32.totalorder %s19, 1
      %p121 = scmp.ne.s32.totalorder %s116, %s118
      %p122 = scmp.eq.s32.totalorder %s19, 0
      %p123 = por %p121, %p122
      %p124 = scmp.ne.s32.totalorder %s116, %s118
      %p125 = scmp.eq.s32.totalorder %s24, 1
      %p126 = por %p124, %p125
      %p127 = scmp.ne.s32.totalorder %s118, %s119
      %p128 = scmp.eq.s32.totalorder %s24, 0
      %p129 = por %p127, %p128
      %p130 = scmp.ne.s32.totalorder %s118, %s119
      %p131 = scmp.eq.s32.totalorder %s25, 1
      %p132 = por %p130, %p131
      %p134 = scmp.ne.s32.totalorder %s119, %s133
      %p135 = scmp.eq.s32.totalorder %s25, 0
      %p136 = por %p134, %p135
      %s138 = sadd.s32 %s137, 1
      %p141 = scmp.eq.s32.totalorder %s19, 1
      %p142 = scmp.ne.s32.totalorder %s137, %s139
      %p143 = scmp.eq.s32.totalorder %s19, 0
      %p144 = por %p142, %p143
      %p145 = scmp.ne.s32.totalorder %s137, %s139
      %p146 = scmp.eq.s32.totalorder %s24, 1
      %p147 = por %p145, %p146
      %p148 = scmp.ne.s32.totalorder %s139, %s140
      %p149 = scmp.eq.s32.totalorder %s24, 0
      %p150 = por %p148, %p149
      %p151 = scmp.ne.s32.totalorder %s139, %s140
      %p152 = scmp.eq.s32.totalorder %s25, 1
      %p153 = por %p151, %p152
      %p155 = scmp.ne.s32.totalorder %s140, %s154
      %p156 = scmp.eq.s32.totalorder %s25, 0
      %p157 = por %p155, %p156
      %s159 = sadd.s32 %s158, 1
      %p162 = scmp.eq.s32.totalorder %s19, 1
      %p163 = scmp.ne.s32.totalorder %s158, %s160
      %p164 = scmp.eq.s32.totalorder %s19, 0
      %p165 = por %p163, %p164
      %p166 = scmp.ne.s32.totalorder %s158, %s160
      %p167 = scmp.eq.s32.totalorder %s24, 1
      %p168 = por %p166, %p167
      %p169 = scmp.ne.s32.totalorder %s160, %s161
      %p170 = scmp.eq.s32.totalorder %s24, 0
      %p171 = por %p169, %p170
      %p172 = scmp.ne.s32.totalorder %s160, %s161
      %p173 = scmp.eq.s32.totalorder %s25, 1
      %p174 = por %p172, %p173
      %p176 = scmp.ne.s32.totalorder %s161, %s175
      %p177 = scmp.eq.s32.totalorder %s25, 0
      %p178 = por %p176, %p177
      %s179 = ssub.s32 %s19, %s26
      %p180 = scmp.eq.s32.totalorder %s179, 0
      %s182 = sadd.s32 %s181, 1
      %s183 = scalar_select %p180, %s181, %s182
      %p186 = pneg %p180
      %p187 = scmp.eq.s32.totalorder %s19, 1
      %p188 = por %p186, %p187
      %p189 = scmp.ne.s32.totalorder %s181, %s184
      %p190 = scmp.eq.s32.totalorder %s19, 0
      %p191 = por %p189, %p190
      %p192 = scmp.ne.s32.totalorder %s181, %s184
      %p193 = scmp.eq.s32.totalorder %s24, 1
      %p194 = por %p192, %p193
      %p195 = scmp.ne.s32.totalorder %s184, %s185
      %p196 = scmp.eq.s32.totalorder %s24, 0
      %p197 = por %p195, %p196
      %p198 = scmp.ne.s32.totalorder %s184, %s185
      %p199 = scmp.eq.s32.totalorder %s25, 1
      %p200 = por %p198, %p199
      %p202 = scmp.ne.s32.totalorder %s185, %s201
      %p203 = scmp.eq.s32.totalorder %s25, 0
      %p204 = por %p202, %p203
      %p205 = scmp.le.s32.totalorder 1, %s19
      %p206 = scmp.lt.s32.totalorder %s19, 3
      %p207 = pnand %p205, %p206
      %p208 = pneg %p207
      // Predicated region
      $region9: #{tpu_custom_call.1} parent=5 // pred_check
        _
      $region10: #{tpu_custom_call.1} parent=5 // pred_check_branch
        %210 = sbr.rel (%p207) target = $region12
      $region11: #{tpu_custom_call.1} parent=5 // pred_region
        %s211 = ssub.s32 %s19, 1
        // Predicated region
        $region13: #{tpu_custom_call.1} parent=11 // pred_check
          %p212 = pneg %p66
        $region14: #{tpu_custom_call.1} parent=11 // pred_check_branch
          %214 = sbr.rel (%p212) target = $region16
        $region15: #{tpu_custom_call.1} parent=11 // pred_region
          _
        $region16: #{tpu_custom_call.1} parent=11 // pred_fallthru
          _
        // Predicated region
        $region17: #{tpu_custom_call.1} parent=11 // pred_check
          %p215 = pneg %p87
        $region18: #{tpu_custom_call.1} parent=11 // pred_check_branch
          %217 = sbr.rel (%p215) target = $region20
        $region19: #{tpu_custom_call.1} parent=11 // pred_region
          _
        $region20: #{tpu_custom_call.1} parent=11 // pred_fallthru
          _
        // Predicated region
        $region21: #{tpu_custom_call.1} parent=11 // pred_check
          %p218 = pneg %p108
        $region22: #{tpu_custom_call.1} parent=11 // pred_check_branch
          %220 = sbr.rel (%p218) target = $region24
        $region23: #{tpu_custom_call.1} parent=11 // pred_region
          _
        $region24: #{tpu_custom_call.1} parent=11 // pred_fallthru
          _
        // Predicated region
        $region25: #{tpu_custom_call.1} parent=11 // pred_check
          %p221 = pneg %p129
        $region26: #{tpu_custom_call.1} parent=11 // pred_check_branch
          %223 = sbr.rel (%p221) target = $region28
        $region27: #{tpu_custom_call.1} parent=11 // pred_region
          _
        $region28: #{tpu_custom_call.1} parent=11 // pred_fallthru
          _
        // Predicated region
        $region29: #{tpu_custom_call.1} parent=11 // pred_check
          %p224 = pneg %p150
        $region30: #{tpu_custom_call.1} parent=11 // pred_check_branch
          %226 = sbr.rel (%p224) target = $region32
        $region31: #{tpu_custom_call.1} parent=11 // pred_region
          _
        $region32: #{tpu_custom_call.1} parent=11 // pred_fallthru
          _
        // Predicated region
        $region33: #{tpu_custom_call.1} parent=11 // pred_check
          %p227 = pneg %p171
        $region34: #{tpu_custom_call.1} parent=11 // pred_check_branch
          %229 = sbr.rel (%p227) target = $region36
        $region35: #{tpu_custom_call.1} parent=11 // pred_region
          _
        $region36: #{tpu_custom_call.1} parent=11 // pred_fallthru
          _
      $region12: #{tpu_custom_call.1} parent=5 // pred_fallthru
        _
      %p230 = scmp.lt.s32.totalorder %s19, 2
      // Predicated region
      $region37: #{tpu_custom_call.1} parent=5 // pred_check
        %p231 = pneg %p230
      $region38: #{tpu_custom_call.1} parent=5 // pred_check_branch
        %233 = sbr.rel (%p231) target = $region40
      $region39: #{tpu_custom_call.1} parent=5 // pred_region
        // Predicated region
        $region41: #{tpu_custom_call.1} parent=39 // pred_check
          %p234 = pneg %p39
        $region42: #{tpu_custom_call.1} parent=39 // pred_check_branch
          %236 = sbr.rel (%p234) target = $region44
        $region43: #{tpu_custom_call.1} parent=39 // pred_region
          %s237 = sand.u32 %s29, 1
          %s238 = scalar_lea.sflag [#allocation3], %s237
          %s239 = sand.u32 %s29, 1
          %s240 = smul.addr %s239, 24
          %s241 = scalar_lea.vmem [#allocation2], %s240
          %s243 = ssub.s32 384, 384
          %244 = vsyncadd %s238, %s243
          %s245 = smul.addr %s19, 3
          %s246 = smul.addr %s245, 128
          %s247 = scalar_lea.hbm %s0, %s246
          %s249 = sshll.u32 %s241, 4
          %s250 = int_to_ptr.vmem [resolvable:$true] %s249
          %252 = dma.hbm_to_vmem [thread:$0]  %s247, 384, %s250, %s238
        $region44: #{tpu_custom_call.1} parent=39 // pred_fallthru
          _
      $region40: #{tpu_custom_call.1} parent=5 // pred_fallthru
        _
      %p253 = scmp.le.s32.totalorder 1, %s19
      %p254 = scmp.lt.s32.totalorder %s19, 3
      %p255 = pnand %p253, %p254
      %p256 = pneg %p255
      // Predicated region
      $region45: #{tpu_custom_call.1} parent=5 // pred_check
        _
      $region46: #{tpu_custom_call.1} parent=5 // pred_check_branch
        %258 = sbr.rel (%p255) target = $region48
      $region47: #{tpu_custom_call.1} parent=5 // pred_region
        %s259 = ssub.s32 %s19, 1
        %s260 = sand.u32 %s32, 1
        %s261 = scalar_lea.sflag [#allocation3], %s260
        %s262 = sand.u32 %s32, 1
        %s263 = smul.addr %s262, 24
        %s264 = scalar_lea.vmem [#allocation2], %s263
        // Predicated region
        $region49: #{tpu_custom_call.1} parent=47 // pred_check
          %p265 = pneg %p45
        $region50: #{tpu_custom_call.1} parent=47 // pred_check_branch
          %267 = sbr.rel (%p265) target = $region52
        $region51: #{tpu_custom_call.1} parent=47 // pred_region
          %268 = dma.done %s261, 384
        $region52: #{tpu_custom_call.1} parent=47 // pred_fallthru
          _
        %s269 = sand.u32 %s32, 1
        %s270 = scalar_lea.sflag [#allocation3], %s269
        %s271 = sand.u32 %s32, 1
        %s272 = smul.addr %s271, 24
        %s273 = scalar_lea.vmem [#allocation2], %s272
        %p274 = pneg %p45
        %p275 = pneg %p42
        %p276 = pneg %p66
        %p277 = pneg %p63
        %p278 = pneg %p87
        %p279 = pneg %p84
        %p280 = pneg %p108
        %p281 = pneg %p105
        %p282 = pneg %p129
        %p283 = pneg %p126
        %p284 = pneg %p150
        %p285 = pneg %p147
        %p286 = pneg %p171
        %p287 = pneg %p168
        %p288 = pneg %p197
        %p289 = pneg %p194
        %s290 = sand.u32 %s184, 1
        %s291 = scalar_lea.sflag [#allocation4], %s290
        %s292 = sand.u32 %s184, 1
        %s293 = smul.addr %s292, 24
        %s294 = scalar_lea.vmem [#allocation5], %s293
        %v296 = vld [vmem:[%s264] sm:$0xff]
        %v297 = vld [vmem:[%s264 + $0x8] sm:$0xff]
        %v298 = vld [vmem:[%s264 + $0x10] sm:$0xff]
        %299 = vrot.lane.b32.xlu0 %v296, 127
        %v300 = vpop.permute.xlu0 %299
        %301 = vrot.lane.b32.xlu0 %v297, 127
        %v302 = vpop.permute.xlu0 %301
        %303 = vrot.lane.b32.xlu0 %v298, 127
        %v304 = vpop.permute.xlu0 %303
        %v305 = vlaneseq
        %v306 = vand.u32 %v305, 127
        %vm307 = vcmp.lt.s32.totalorder %v306, 127
        %v308 = vsel %vm307, %v302, %v304
        %v309 = vsel %vm307, %v300, %v302
        %v310 = vsel %vm307, %v304, %v300
        %311 = vrot.lane.b32.xlu0 %v296, 126
        %v312 = vpop.permute.xlu0 %311
        %313 = vrot.lane.b32.xlu0 %v297, 126
        %v314 = vpop.permute.xlu0 %313
        %315 = vrot.lane.b32.xlu0 %v298, 126
        %v316 = vpop.permute.xlu0 %315
        %vm317 = vcmp.lt.s32.totalorder %v306, 126
        %v318 = vsel %vm317, %v314, %v316
        %v319 = vsel %vm317, %v312, %v314
        %v320 = vsel %vm317, %v316, %v312
        %321 = vrot.lane.b32.xlu0 %v296, 110
        %v322 = vpop.permute.xlu0 %321
        %323 = vrot.lane.b32.xlu0 %v309, 110
        %v324 = vpop.permute.xlu0 %323
        %325 = vrot.lane.b32.xlu0 %v319, 110
        %v326 = vpop.permute.xlu0 %325
        %327 = vrot.lane.b32.xlu0 %v297, 110
        %v328 = vpop.permute.xlu0 %327
        %329 = vrot.lane.b32.xlu0 %v308, 110
        %v330 = vpop.permute.xlu0 %329
        %331 = vrot.lane.b32.xlu0 %v318, 110
        %v332 = vpop.permute.xlu0 %331
        %333 = vrot.lane.b32.xlu0 %v298, 110
        %v334 = vpop.permute.xlu0 %333
        %335 = vrot.lane.b32.xlu0 %v310, 110
        %v336 = vpop.permute.xlu0 %335
        %337 = vrot.lane.b32.xlu0 %v320, 110
        %v338 = vpop.permute.xlu0 %337
        %vm339 = vcmp.lt.s32.totalorder %v306, 110
        %v340 = vsel %vm339, %v328, %v334
        %v341 = vsel %vm339, %v330, %v336
        %v342 = vsel %vm339, %v332, %v338
        %v343 = vsel %vm339, %v322, %v328
        %v344 = vsel %vm339, %v324, %v330
        %v345 = vsel %vm339, %v326, %v332
        %v346 = vsel %vm339, %v334, %v322
        %v347 = vsel %vm339, %v336, %v324
        %v348 = vsel %vm339, %v338, %v326
        %349 = vrot.lane.b32.xlu0 %v296, 92
        %v350 = vpop.permute.xlu0 %349
        %351 = vrot.lane.b32.xlu0 %v309, 92
        %v352 = vpop.permute.xlu0 %351
        %353 = vrot.lane.b32.xlu0 %v319, 92
        %v354 = vpop.permute.xlu0 %353
        %355 = vrot.lane.b32.xlu0 %v297, 92
        %v356 = vpop.permute.xlu0 %355
        %357 = vrot.lane.b32.xlu0 %v308, 92
        %v358 = vpop.permute.xlu0 %357
        %359 = vrot.lane.b32.xlu0 %v318, 92
        %v360 = vpop.permute.xlu0 %359
        %361 = vrot.lane.b32.xlu0 %v298, 92
        %v362 = vpop.permute.xlu0 %361
        %363 = vrot.lane.b32.xlu0 %v310, 92
        %v364 = vpop.permute.xlu0 %363
        %365 = vrot.lane.b32.xlu0 %v320, 92
        %v366 = vpop.permute.xlu0 %365
        %vm367 = vcmp.lt.s32.totalorder %v306, 92
        %v368 = vsel %vm367, %v356, %v362
        %v369 = vsel %vm367, %v358, %v364
        %v370 = vsel %vm367, %v360, %v366
        %v371 = vsel %vm367, %v350, %v356
        %v372 = vsel %vm367, %v352, %v358
        %v373 = vsel %vm367, %v354, %v360
        %v374 = vsel %vm367, %v362, %v350
        %v375 = vsel %vm367, %v364, %v352
        %v376 = vsel %vm367, %v366, %v354
        %v377 = vld [vmem:[%s1] sm:$0xf]
        %v378 = vpack.c.bf16 %v309, %v296
        %v379 = vpack.c.bf16 %v308, %v297
        %v380 = vpack.c.bf16 %v310, %v298
        %v381 = vpack.c.bf16 %v319, %v319
        %v382 = vpack.c.bf16 %v318, %v318
        %v383 = vpack.c.bf16 %v320, %v320
        %s384 = scalar_lea.vmem %s1, 4
        %v385 = vld [vmem:[%s384] sm:$0xf]
        %v386 = vpack.c.bf16 %v344, %v343
        %v387 = vpack.c.bf16 %v341, %v340
        %v388 = vpack.c.bf16 %v347, %v346
        %v389 = vpack.c.bf16 %v345, %v345
        %v390 = vpack.c.bf16 %v342, %v342
        %v391 = vpack.c.bf16 %v348, %v348
        %vm392 = vcmask 195584
        %v394 = vsel %vm392, %v385, 0
        %vm396 = vcmask 1043456
        %v398 = vsel %vm396, %v389, 0
        %v401 = vsel %vm396, %v390, 0
        %v404 = vsel %vm396, %v391, 0
        %406 = vmatprep.subr.bf16.mxu0 0
        %407 = vmatpush1.bf16.msra.mxu0 0
        %408 = vmatprep.subr.bf16.mxu0 0
        %409 = vmatpush1.bf16.msra.mxu0 0
        %410 = vmatprep.subr.bf16.mxu0 0
        %411 = vmatpush1.bf16.msra.mxu0 0
        %412 = vmatprep.subr.bf16.mxu0 0
        %413 = vmatpush1.bf16.msra.mxu0 0
        %414 = vmatprep.subr.bf16.mxu0 0
        %415 = vmatpush1.bf16.msra.mxu0 0
        %416 = vmatprep.subr.bf16.mxu0 0
        %417 = vmatpush1.bf16.msra.mxu0 0
        %418 = vmatprep.subr.bf16.mxu0 %v401
        %419 = vmatpush1.bf16.msra.mxu0 %v398
        %420 = vmatprep.subr.bf16.mxu0 %v387
        %421 = vmatpush1.bf16.msra.mxu0 %v386
        %422 = vmatprep.subr.bf16.mxu0 0
        %423 = vmatpush2.bf16.msra.mxu0 0
        %424 = vmatprep.subr.bf16.mxu0 0
        %425 = vmatpush2.bf16.msra.mxu0 0
        %426 = vmatprep.subr.bf16.mxu0 0
        %427 = vmatpush2.bf16.msra.mxu0 0
        %428 = vmatprep.subr.bf16.mxu0 0
        %429 = vmatpush2.bf16.msra.mxu0 0
        %430 = vmatprep.subr.bf16.mxu0 0
        %431 = vmatpush2.bf16.msra.mxu0 0
        %432 = vmatprep.subr.bf16.mxu0 0
        %433 = vmatpush2.bf16.msra.mxu0 0
        %434 = vmatprep.subr.bf16.mxu0 0
        %435 = vmatpush2.bf16.msra.mxu0 0
        %436 = vmatprep.subr.bf16.mxu0 0
        %437 = vmatpush2.bf16.msra.mxu0 0
        %438 = vmatprep.mubr.bf16.mxu0 0
        %439 = vmatmul.mubr.bf16.gmra.mxu0 %v394
        %v440 = vpop.f32.mrf.mxu0
        %v441 = vadd.f32 0.0, %v440
        %v442 = vpop.f32.mrf.mxu0
        %v443 = vadd.f32 0.0, %v442
        %v444 = vpop.f32.mrf.mxu0
        %v445 = vpop.f32.mrf.mxu0
        %446 = vdwg.mxu0
        %447 = vmatprep.subr.bf16.mxu0 0
        %448 = vmatpush1.bf16.msra.mxu0 0
        %449 = vmatprep.subr.bf16.mxu0 0
        %450 = vmatpush1.bf16.msra.mxu0 0
        %451 = vmatprep.subr.bf16.mxu0 0
        %452 = vmatpush1.bf16.msra.mxu0 0
        %453 = vmatprep.subr.bf16.mxu0 0
        %454 = vmatpush1.bf16.msra.mxu0 0
        %455 = vmatprep.subr.bf16.mxu0 0
        %456 = vmatpush1.bf16.msra.mxu0 0
        %457 = vmatprep.subr.bf16.mxu0 0
        %458 = vmatpush1.bf16.msra.mxu0 0
        %459 = vmatprep.subr.bf16.mxu0 0
        %460 = vmatpush1.bf16.msra.mxu0 %v404
        %461 = vmatprep.subr.bf16.mxu0 0
        %462 = vmatpush1.bf16.msra.mxu0 %v388
        %463 = vmatprep.subr.bf16.mxu0 0
        %464 = vmatpush2.bf16.msra.mxu0 0
        %465 = vmatprep.subr.bf16.mxu0 0
        %466 = vmatpush2.bf16.msra.mxu0 0
        %467 = vmatprep.subr.bf16.mxu0 0
        %468 = vmatpush2.bf16.msra.mxu0 0
        %469 = vmatprep.subr.bf16.mxu0 0
        %470 = vmatpush2.bf16.msra.mxu0 0
        %471 = vmatprep.subr.bf16.mxu0 0
        %472 = vmatpush2.bf16.msra.mxu0 0
        %473 = vmatprep.subr.bf16.mxu0 0
        %474 = vmatpush2.bf16.msra.mxu0 0
        %475 = vmatprep.subr.bf16.mxu0 0
        %476 = vmatpush2.bf16.msra.mxu0 0
        %477 = vmatprep.subr.bf16.mxu0 0
        %478 = vmatpush2.bf16.msra.mxu0 0
        %479 = vmatprep.mubr.bf16.mxu0 0
        %480 = vmatmul.mubr.bf16.gmra.mxu0 %v394
        %v481 = vpop.f32.mrf.mxu0
        %v482 = vadd.f32 0.0, %v481
        %v483 = vpop.f32.mrf.mxu0
        %v484 = vpop.f32.mrf.mxu0
        %v485 = vpop.f32.mrf.mxu0
        %486 = vdwg.mxu0
        %v488 = vsel %vm392, %v377, 0
        %v491 = vsel %vm396, %v381, 0
        %v494 = vsel %vm396, %v382, 0
        %v497 = vsel %vm396, %v383, 0
        %499 = vmatprep.subr.bf16.mxu0 0
        %500 = vmatpush1.bf16.msra.mxu0 0
        %501 = vmatprep.subr.bf16.mxu0 0
        %502 = vmatpush1.bf16.msra.mxu0 0
        %503 = vmatprep.subr.bf16.mxu0 0
        %504 = vmatpush1.bf16.msra.mxu0 0
        %505 = vmatprep.subr.bf16.mxu0 0
        %506 = vmatpush1.bf16.msra.mxu0 0
        %507 = vmatprep.subr.bf16.mxu0 0
        %508 = vmatpush1.bf16.msra.mxu0 0
        %509 = vmatprep.subr.bf16.mxu0 0
        %510 = vmatpush1.bf16.msra.mxu0 0
        %511 = vmatprep.subr.bf16.mxu0 %v494
        %512 = vmatpush1.bf16.msra.mxu0 %v491
        %513 = vmatprep.subr.bf16.mxu0 %v379
        %514 = vmatpush1.bf16.msra.mxu0 %v378
        %515 = vmatprep.subr.bf16.mxu0 0
        %516 = vmatpush2.bf16.msra.mxu0 0
        %517 = vmatprep.subr.bf16.mxu0 0
        %518 = vmatpush2.bf16.msra.mxu0 0
        %519 = vmatprep.subr.bf16.mxu0 0
        %520 = vmatpush2.bf16.msra.mxu0 0
        %521 = vmatprep.subr.bf16.mxu0 0
        %522 = vmatpush2.bf16.msra.mxu0 0
        %523 = vmatprep.subr.bf16.mxu0 0
        %524 = vmatpush2.bf16.msra.mxu0 0
        %525 = vmatprep.subr.bf16.mxu0 0
        %526 = vmatpush2.bf16.msra.mxu0 0
        %527 = vmatprep.subr.bf16.mxu0 0
        %528 = vmatpush2.bf16.msra.mxu0 0
        %529 = vmatprep.subr.bf16.mxu0 0
        %530 = vmatpush2.bf16.msra.mxu0 0
        %531 = vmatprep.mubr.bf16.mxu0 0
        %532 = vmatmul.mubr.bf16.gmra.mxu0 %v488
        %v533 = vpop.f32.mrf.mxu0
        %v534 = vadd.f32 %v441, %v533
        %v535 = vpop.f32.mrf.mxu0
        %v536 = vadd.f32 %v443, %v535
        %v537 = vpop.f32.mrf.mxu0
        %v538 = vpop.f32.mrf.mxu0
        %539 = vdwg.mxu0
        %540 = vmatprep.subr.bf16.mxu0 0
        %541 = vmatpush1.bf16.msra.mxu0 0
        %542 = vmatprep.subr.bf16.mxu0 0
        %543 = vmatpush1.bf16.msra.mxu0 0
        %544 = vmatprep.subr.bf16.mxu0 0
        %545 = vmatpush1.bf16.msra.mxu0 0
        %546 = vmatprep.subr.bf16.mxu0 0
        %547 = vmatpush1.bf16.msra.mxu0 0
        %548 = vmatprep.subr.bf16.mxu0 0
        %549 = vmatpush1.bf16.msra.mxu0 0
        %550 = vmatprep.subr.bf16.mxu0 0
        %551 = vmatpush1.bf16.msra.mxu0 0
        %552 = vmatprep.subr.bf16.mxu0 0
        %553 = vmatpush1.bf16.msra.mxu0 %v497
        %554 = vmatprep.subr.bf16.mxu0 0
        %555 = vmatpush1.bf16.msra.mxu0 %v380
        %556 = vmatprep.subr.bf16.mxu0 0
        %557 = vmatpush2.bf16.msra.mxu0 0
        %558 = vmatprep.subr.bf16.mxu0 0
        %559 = vmatpush2.bf16.msra.mxu0 0
        %560 = vmatprep.subr.bf16.mxu0 0
        %561 = vmatpush2.bf16.msra.mxu0 0
        %562 = vmatprep.subr.bf16.mxu0 0
        %563 = vmatpush2.bf16.msra.mxu0 0
        %564 = vmatprep.subr.bf16.mxu0 0
        %565 = vmatpush2.bf16.msra.mxu0 0
        %566 = vmatprep.subr.bf16.mxu0 0
        %567 = vmatpush2.bf16.msra.mxu0 0
        %568 = vmatprep.subr.bf16.mxu0 0
        %569 = vmatpush2.bf16.msra.mxu0 0
        %570 = vmatprep.subr.bf16.mxu0 0
        %571 = vmatpush2.bf16.msra.mxu0 0
        %572 = vmatprep.mubr.bf16.mxu0 0
        %573 = vmatmul.mubr.bf16.gmra.mxu0 %v488
        %v574 = vpop.f32.mrf.mxu0
        %v575 = vadd.f32 %v482, %v574
        %v576 = vpop.f32.mrf.mxu0
        %v577 = vpop.f32.mrf.mxu0
        %v578 = vpop.f32.mrf.mxu0
        %579 = vdwg.mxu0
        %s580 = scalar_lea.vmem %s1, 8
        %v581 = vld [vmem:[%s580] sm:$0xf]
        %v582 = vpack.c.bf16 %v372, %v371
        %v583 = vpack.c.bf16 %v369, %v368
        %v584 = vpack.c.bf16 %v375, %v374
        %v585 = vpack.c.bf16 %v373, %v373
        %v586 = vpack.c.bf16 %v370, %v370
        %v587 = vpack.c.bf16 %v376, %v376
        %v589 = vsel %vm392, %v581, 0
        %v592 = vsel %vm396, %v585, 0
        %v595 = vsel %vm396, %v586, 0
        %v598 = vsel %vm396, %v587, 0
        %600 = vmatprep.subr.bf16.mxu0 0
        %601 = vmatpush1.bf16.msra.mxu0 0
        %602 = vmatprep.subr.bf16.mxu0 0
        %603 = vmatpush1.bf16.msra.mxu0 0
        %604 = vmatprep.subr.bf16.mxu0 0
        %605 = vmatpush1.bf16.msra.mxu0 0
        %606 = vmatprep.subr.bf16.mxu0 0
        %607 = vmatpush1.bf16.msra.mxu0 0
        %608 = vmatprep.subr.bf16.mxu0 0
        %609 = vmatpush1.bf16.msra.mxu0 0
        %610 = vmatprep.subr.bf16.mxu0 0
        %611 = vmatpush1.bf16.msra.mxu0 0
        %612 = vmatprep.subr.bf16.mxu0 %v595
        %613 = vmatpush1.bf16.msra.mxu0 %v592
        %614 = vmatprep.subr.bf16.mxu0 %v583
        %615 = vmatpush1.bf16.msra.mxu0 %v582
        %616 = vmatprep.subr.bf16.mxu0 0
        %617 = vmatpush2.bf16.msra.mxu0 0
        %618 = vmatprep.subr.bf16.mxu0 0
        %619 = vmatpush2.bf16.msra.mxu0 0
        %620 = vmatprep.subr.bf16.mxu0 0
        %621 = vmatpush2.bf16.msra.mxu0 0
        %622 = vmatprep.subr.bf16.mxu0 0
        %623 = vmatpush2.bf16.msra.mxu0 0
        %624 = vmatprep.subr.bf16.mxu0 0
        %625 = vmatpush2.bf16.msra.mxu0 0
        %626 = vmatprep.subr.bf16.mxu0 0
        %627 = vmatpush2.bf16.msra.mxu0 0
        %628 = vmatprep.subr.bf16.mxu0 0
        %629 = vmatpush2.bf16.msra.mxu0 0
        %630 = vmatprep.subr.bf16.mxu0 0
        %631 = vmatpush2.bf16.msra.mxu0 0
        %632 = vmatprep.mubr.bf16.mxu0 0
        %633 = vmatmul.mubr.bf16.gmra.mxu0 %v589
        %v634 = vpop.f32.mrf.mxu0
        %v635 = vadd.f32 0.0, %v634
        %v636 = vpop.f32.mrf.mxu0
        %v637 = vadd.f32 0.0, %v636
        %v638 = vpop.f32.mrf.mxu0
        %v639 = vpop.f32.mrf.mxu0
        %640 = vdwg.mxu0
        %641 = vmatprep.subr.bf16.mxu0 0
        %642 = vmatpush1.bf16.msra.mxu0 0
        %643 = vmatprep.subr.bf16.mxu0 0
        %644 = vmatpush1.bf16.msra.mxu0 0
        %645 = vmatprep.subr.bf16.mxu0 0
        %646 = vmatpush1.bf16.msra.mxu0 0
        %647 = vmatprep.subr.bf16.mxu0 0
        %648 = vmatpush1.bf16.msra.mxu0 0
        %649 = vmatprep.subr.bf16.mxu0 0
        %650 = vmatpush1.bf16.msra.mxu0 0
        %651 = vmatprep.subr.bf16.mxu0 0
        %652 = vmatpush1.bf16.msra.mxu0 0
        %653 = vmatprep.subr.bf16.mxu0 0
        %654 = vmatpush1.bf16.msra.mxu0 %v598
        %655 = vmatprep.subr.bf16.mxu0 0
        %656 = vmatpush1.bf16.msra.mxu0 %v584
        %657 = vmatprep.subr.bf16.mxu0 0
        %658 = vmatpush2.bf16.msra.mxu0 0
        %659 = vmatprep.subr.bf16.mxu0 0
        %660 = vmatpush2.bf16.msra.mxu0 0
        %661 = vmatprep.subr.bf16.mxu0 0
        %662 = vmatpush2.bf16.msra.mxu0 0
        %663 = vmatprep.subr.bf16.mxu0 0
        %664 = vmatpush2.bf16.msra.mxu0 0
        %665 = vmatprep.subr.bf16.mxu0 0
        %666 = vmatpush2.bf16.msra.mxu0 0
        %667 = vmatprep.subr.bf16.mxu0 0
        %668 = vmatpush2.bf16.msra.mxu0 0
        %669 = vmatprep.subr.bf16.mxu0 0
        %670 = vmatpush2.bf16.msra.mxu0 0
        %671 = vmatprep.subr.bf16.mxu0 0
        %672 = vmatpush2.bf16.msra.mxu0 0
        %673 = vmatprep.mubr.bf16.mxu0 0
        %674 = vmatmul.mubr.bf16.gmra.mxu0 %v589
        %v675 = vpop.f32.mrf.mxu0
        %v676 = vadd.f32 0.0, %v675
        %v677 = vpop.f32.mrf.mxu0
        %v678 = vpop.f32.mrf.mxu0
        %v679 = vpop.f32.mrf.mxu0
        %680 = vdwg.mxu0
        %v681 = vadd.f32 %v534, %v635
        %v682 = vadd.f32 %v536, %v637
        %v683 = vadd.f32 %v575, %v676
        %v684 = vadd.s32 %v306, 128
        %v685 = vadd.s32 %v306, 256
        %v686 = vld [vmem:[%s2] sm:$0xff]
        %688 = vset.pattern.permute.xlu0 0
        %689 = vperm.xlu0 %688, %v686
        %v690 = vpop.permute.xlu0 %689
        %v692 = vmul.f32 %v681, %v690
        %v693 = vmul.f32 %v682, %v690
        %v694 = vmul.f32 %v683, %v690
        %v695 = vld [vmem:[%s3] sm:$0xff]
        %697 = vset.pattern.permute.xlu0 0
        %698 = vperm.xlu0 %697, %v695
        %v699 = vpop.permute.xlu0 %698
        %v701 = vadd.f32 %v692, %v699
        %v702 = vadd.f32 %v693, %v699
        %v703 = vadd.f32 %v694, %v699
        %v704 = vmax.f32 %v701, 0.0
        %v705 = vmax.f32 %v702, 0.0
        %v706 = vmax.f32 %v703, 0.0
        %vm707 = vcmp.lt.s32.totalorder %v306, 0
        %v708 = vsub.s32 0, %v306
        %v709 = vsel %vm707, %v708, %v306
        %v710 = vmul.u32.u64.compose %v709, 3817748708
        %v711 = vextract.low.u32 %v710
        %v712 = vextract.high.u32 %v710
        %v713 = vshrl.u32 %v712, 4
        %v714 = vmul.u32 %v713, 18
        %v715 = vsub.s32 %v709, %v714
        %v716 = vsub.s32 0, %v715
        %v717 = vsel %vm707, %v716, %v715
        %vm718 = vcmp.lt.s32.totalorder %v684, 0
        %v719 = vsub.s32 0, %v684
        %v720 = vsel %vm718, %v719, %v684
        %v721 = vmul.u32.u64.compose %v720, 3817748708
        %v722 = vextract.low.u32 %v721
        %v723 = vextract.high.u32 %v721
        %v724 = vshrl.u32 %v723, 4
        %v725 = vmul.u32 %v724, 18
        %v726 = vsub.s32 %v720, %v725
        %v727 = vsub.s32 0, %v726
        %v728 = vsel %vm718, %v727, %v726
        %vm729 = vcmp.lt.s32.totalorder %v685, 0
        %v730 = vsub.s32 0, %v685
        %v731 = vsel %vm729, %v730, %v685
        %v732 = vmul.u32.u64.compose %v731, 3817748708
        %v733 = vextract.low.u32 %v732
        %v734 = vextract.high.u32 %v732
        %v735 = vshrl.u32 %v734, 4
        %v736 = vmul.u32 %v735, 18
        %v737 = vsub.s32 %v731, %v736
        %v738 = vsub.s32 0, %v737
        %v739 = vsel %vm729, %v738, %v737
        %vm740 = vcmp.ne.s32.totalorder %v717, 0
        %vm741 = vcmp.ne.s32.totalorder %v728, 0
        %vm742 = vcmp.ne.s32.totalorder %v739, 0
        %vm743 = vcmp.lt.s32.totalorder %v717, 0
        %vm744 = vcmp.lt.s32.totalorder %v728, 0
        %vm745 = vcmp.lt.s32.totalorder %v739, 0
        %vm746 = vmand %vm743, %vm740
        %vm747 = vmand %vm744, %vm741
        %vm748 = vmand %vm745, %vm742
        %v749 = vadd.s32 %v717, 18
        %v750 = vadd.s32 %v728, 18
        %v751 = vadd.s32 %v739, 18
        %v752 = vsel %vm746, %v749, %v717
        %v753 = vsel %vm747, %v750, %v728
        %v754 = vsel %vm748, %v751, %v739
        %vm755 = vcmp.lt.s32.totalorder %v752, 16
        %vm756 = vcmp.lt.s32.totalorder %v753, 16
        %vm757 = vcmp.lt.s32.totalorder %v754, 16
        %vm758 = vcmp.lt.s32.totalorder %v306, 288
        %vm759 = vcmp.lt.s32.totalorder %v684, 288
        %vm760 = vcmp.lt.s32.totalorder %v685, 288
        %vm761 = vmand %vm755, %vm758
        %vm762 = vmand %vm756, %vm759
        %vm763 = vmand %vm757, %vm760
        %v764 = vsel %vm761, 1, 0
        %v765 = vsel %vm762, 1, 0
        %v766 = vsel %vm763, 1, 0
        %vm767 = vcmp.eq.s32.totalorder %v764, 1
        %vm768 = vcmp.eq.s32.totalorder %v765, 1
        %vm769 = vcmp.eq.s32.totalorder %v766, 1
        %v770 = vsel %vm767, %v704, 0.0
        %v771 = vsel %vm768, %v705, 0.0
        %v772 = vsel %vm769, %v706, 0.0
        %773 = vrot.lane.b32.xlu0 %v770, 1
        %v774 = vpop.permute.xlu0 %773
        %775 = vrot.lane.b32.xlu0 %v771, 1
        %v776 = vpop.permute.xlu0 %775
        %777 = vrot.lane.b32.xlu0 %v772, 1
        %v778 = vpop.permute.xlu0 %777
        %vm779 = vcmp.lt.s32.totalorder %v306, 1
        %v780 = vsel %vm779, %v776, %v778
        %v781 = vsel %vm779, %v774, %v776
        %v782 = vsel %vm779, %v778, %v774
        %783 = vrot.lane.b32.xlu0 %v770, 127
        %v784 = vpop.permute.xlu0 %783
        %785 = vrot.lane.b32.xlu0 %v771, 127
        %v786 = vpop.permute.xlu0 %785
        %787 = vrot.lane.b32.xlu0 %v772, 127
        %v788 = vpop.permute.xlu0 %787
        %v789 = vsel %vm307, %v786, %v788
        %v790 = vsel %vm307, %v784, %v786
        %v791 = vsel %vm307, %v788, %v784
        %vm792 = vcmp.ge.s32.totalorder %v306, 18
        %vm793 = vcmp.ge.s32.totalorder %v684, 18
        %vm794 = vcmp.ge.s32.totalorder %v685, 18
        %795 = vrot.lane.b32.xlu0 %v782, 18
        %v796 = vpop.permute.xlu0 %795
        %797 = vrot.lane.b32.xlu0 %v770, 18
        %v798 = vpop.permute.xlu0 %797
        %799 = vrot.lane.b32.xlu0 %v790, 18
        %v800 = vpop.permute.xlu0 %799
        %801 = vrot.lane.b32.xlu0 %v781, 18
        %v802 = vpop.permute.xlu0 %801
        %803 = vrot.lane.b32.xlu0 %v771, 18
        %v804 = vpop.permute.xlu0 %803
        %805 = vrot.lane.b32.xlu0 %v789, 18
        %v806 = vpop.permute.xlu0 %805
        %807 = vrot.lane.b32.xlu0 %v780, 18
        %v808 = vpop.permute.xlu0 %807
        %809 = vrot.lane.b32.xlu0 %v772, 18
        %v810 = vpop.permute.xlu0 %809
        %811 = vrot.lane.b32.xlu0 %v791, 18
        %v812 = vpop.permute.xlu0 %811
        %vm813 = vcmp.lt.s32.totalorder %v306, 18
        %v814 = vsel %vm813, %v802, %v808
        %v815 = vsel %vm813, %v804, %v810
        %v816 = vsel %vm813, %v806, %v812
        %v817 = vsel %vm813, %v796, %v802
        %v818 = vsel %vm813, %v798, %v804
        %v819 = vsel %vm813, %v800, %v806
        %v820 = vsel %vm813, %v808, %v796
        %v821 = vsel %vm813, %v810, %v798
        %v822 = vsel %vm813, %v812, %v800
        %v823 = vsel %vm792, 1, 0
        %v824 = vsel %vm793, 1, 0
        %v825 = vsel %vm794, 1, 0
        %vm826 = vcmp.eq.s32.totalorder %v823, 1
        %vm827 = vcmp.eq.s32.totalorder %v824, 1
        %vm828 = vcmp.eq.s32.totalorder %v825, 1
        %v829 = vsel %vm826, %v820, 0.0
        %v830 = vsel %vm827, %v817, 0.0
        %v831 = vsel %vm828, %v814, 0.0
        %v832 = vsel %vm826, %v821, 0.0
        %v833 = vsel %vm827, %v818, 0.0
        %v834 = vsel %vm828, %v815, 0.0
        %v835 = vsel %vm826, %v822, 0.0
        %v836 = vsel %vm827, %v819, 0.0
        %v837 = vsel %vm828, %v816, 0.0
        %vm838 = vcmp.lt.s32.totalorder %v306, 270
        %vm839 = vcmp.lt.s32.totalorder %v684, 270
        %vm840 = vcmp.lt.s32.totalorder %v685, 270
        %841 = vrot.lane.b32.xlu0 %v782, 110
        %v842 = vpop.permute.xlu0 %841
        %843 = vrot.lane.b32.xlu0 %v770, 110
        %v844 = vpop.permute.xlu0 %843
        %845 = vrot.lane.b32.xlu0 %v790, 110
        %v846 = vpop.permute.xlu0 %845
        %847 = vrot.lane.b32.xlu0 %v781, 110
        %v848 = vpop.permute.xlu0 %847
        %849 = vrot.lane.b32.xlu0 %v771, 110
        %v850 = vpop.permute.xlu0 %849
        %851 = vrot.lane.b32.xlu0 %v789, 110
        %v852 = vpop.permute.xlu0 %851
        %853 = vrot.lane.b32.xlu0 %v780, 110
        %v854 = vpop.permute.xlu0 %853
        %855 = vrot.lane.b32.xlu0 %v772, 110
        %v856 = vpop.permute.xlu0 %855
        %857 = vrot.lane.b32.xlu0 %v791, 110
        %v858 = vpop.permute.xlu0 %857
        %v859 = vsel %vm339, %v848, %v854
        %v860 = vsel %vm339, %v850, %v856
        %v861 = vsel %vm339, %v852, %v858
        %v862 = vsel %vm339, %v842, %v848
        %v863 = vsel %vm339, %v844, %v850
        %v864 = vsel %vm339, %v846, %v852
        %v865 = vsel %vm339, %v854, %v842
        %v866 = vsel %vm339, %v856, %v844
        %v867 = vsel %vm339, %v858, %v846
        %v868 = vsel %vm838, 1, 0
        %v869 = vsel %vm839, 1, 0
        %v870 = vsel %vm840, 1, 0
        %vm871 = vcmp.eq.s32.totalorder %v868, 1
        %vm872 = vcmp.eq.s32.totalorder %v869, 1
        %vm873 = vcmp.eq.s32.totalorder %v870, 1
        %v874 = vsel %vm871, %v862, 0.0
        %v875 = vsel %vm872, %v859, 0.0
        %v876 = vsel %vm873, %v865, 0.0
        %v877 = vsel %vm871, %v863, 0.0
        %v878 = vsel %vm872, %v860, 0.0
        %v879 = vsel %vm873, %v866, 0.0
        %v880 = vsel %vm871, %v864, 0.0
        %v881 = vsel %vm872, %v861, 0.0
        %v882 = vsel %vm873, %v867, 0.0
        %v883 = vld [vmem:[%s4] sm:$0xf]
        %v884 = vpack.c.bf16 %v832, %v829
        %v885 = vpack.c.bf16 %v833, %v830
        %v886 = vpack.c.bf16 %v834, %v831
        %v887 = vpack.c.bf16 %v835, %v835
        %v888 = vpack.c.bf16 %v836, %v836
        %v889 = vpack.c.bf16 %v837, %v837
        %s890 = scalar_lea.vmem %s4, 4
        %v891 = vld [vmem:[%s890] sm:$0xf]
        %v892 = vpack.c.bf16 %v770, %v782
        %v893 = vpack.c.bf16 %v771, %v781
        %v894 = vpack.c.bf16 %v772, %v780
        %v895 = vpack.c.bf16 %v790, %v790
        %v896 = vpack.c.bf16 %v789, %v789
        %v897 = vpack.c.bf16 %v791, %v791
        %v899 = vsel %vm392, %v891, 0
        %v902 = vsel %vm396, %v895, 0
        %v905 = vsel %vm396, %v896, 0
        %v908 = vsel %vm396, %v897, 0
        %910 = vmatprep.subr.bf16.mxu0 0
        %911 = vmatpush1.bf16.msra.mxu0 0
        %912 = vmatprep.subr.bf16.mxu0 0
        %913 = vmatpush1.bf16.msra.mxu0 0
        %914 = vmatprep.subr.bf16.mxu0 0
        %915 = vmatpush1.bf16.msra.mxu0 0
        %916 = vmatprep.subr.bf16.mxu0 0
        %917 = vmatpush1.bf16.msra.mxu0 0
        %918 = vmatprep.subr.bf16.mxu0 0
        %919 = vmatpush1.bf16.msra.mxu0 0
        %920 = vmatprep.subr.bf16.mxu0 0
        %921 = vmatpush1.bf16.msra.mxu0 0
        %922 = vmatprep.subr.bf16.mxu0 %v905
        %923 = vmatpush1.bf16.msra.mxu0 %v902
        %924 = vmatprep.subr.bf16.mxu0 %v893
        %925 = vmatpush1.bf16.msra.mxu0 %v892
        %926 = vmatprep.subr.bf16.mxu0 0
        %927 = vmatpush2.bf16.msra.mxu0 0
        %928 = vmatprep.subr.bf16.mxu0 0
        %929 = vmatpush2.bf16.msra.mxu0 0
        %930 = vmatprep.subr.bf16.mxu0 0
        %931 = vmatpush2.bf16.msra.mxu0 0
        %932 = vmatprep.subr.bf16.mxu0 0
        %933 = vmatpush2.bf16.msra.mxu0 0
        %934 = vmatprep.subr.bf16.mxu0 0
        %935 = vmatpush2.bf16.msra.mxu0 0
        %936 = vmatprep.subr.bf16.mxu0 0
        %937 = vmatpush2.bf16.msra.mxu0 0
        %938 = vmatprep.subr.bf16.mxu0 0
        %939 = vmatpush2.bf16.msra.mxu0 0
        %940 = vmatprep.subr.bf16.mxu0 0
        %941 = vmatpush2.bf16.msra.mxu0 0
        %942 = vmatprep.mubr.bf16.mxu0 0
        %943 = vmatmul.mubr.bf16.gmra.mxu0 %v899
        %v944 = vpop.f32.mrf.mxu0
        %v945 = vadd.f32 0.0, %v944
        %v946 = vpop.f32.mrf.mxu0
        %v947 = vadd.f32 0.0, %v946
        %v948 = vpop.f32.mrf.mxu0
        %v949 = vpop.f32.mrf.mxu0
        %950 = vdwg.mxu0
        %951 = vmatprep.subr.bf16.mxu0 0
        %952 = vmatpush1.bf16.msra.mxu0 0
        %953 = vmatprep.subr.bf16.mxu0 0
        %954 = vmatpush1.bf16.msra.mxu0 0
        %955 = vmatprep.subr.bf16.mxu0 0
        %956 = vmatpush1.bf16.msra.mxu0 0
        %957 = vmatprep.subr.bf16.mxu0 0
        %958 = vmatpush1.bf16.msra.mxu0 0
        %959 = vmatprep.subr.bf16.mxu0 0
        %960 = vmatpush1.bf16.msra.mxu0 0
        %961 = vmatprep.subr.bf16.mxu0 0
        %962 = vmatpush1.bf16.msra.mxu0 0
        %963 = vmatprep.subr.bf16.mxu0 0
        %964 = vmatpush1.bf16.msra.mxu0 %v908
        %965 = vmatprep.subr.bf16.mxu0 0
        %966 = vmatpush1.bf16.msra.mxu0 %v894
        %967 = vmatprep.subr.bf16.mxu0 0
        %968 = vmatpush2.bf16.msra.mxu0 0
        %969 = vmatprep.subr.bf16.mxu0 0
        %970 = vmatpush2.bf16.msra.mxu0 0
        %971 = vmatprep.subr.bf16.mxu0 0
        %972 = vmatpush2.bf16.msra.mxu0 0
        %973 = vmatprep.subr.bf16.mxu0 0
        %974 = vmatpush2.bf16.msra.mxu0 0
        %975 = vmatprep.subr.bf16.mxu0 0
        %976 = vmatpush2.bf16.msra.mxu0 0
        %977 = vmatprep.subr.bf16.mxu0 0
        %978 = vmatpush2.bf16.msra.mxu0 0
        %979 = vmatprep.subr.bf16.mxu0 0
        %980 = vmatpush2.bf16.msra.mxu0 0
        %981 = vmatprep.subr.bf16.mxu0 0
        %982 = vmatpush2.bf16.msra.mxu0 0
        %983 = vmatprep.mubr.bf16.mxu0 0
        %984 = vmatmul.mubr.bf16.gmra.mxu0 %v899
        %v985 = vpop.f32.mrf.mxu0
        %v986 = vadd.f32 0.0, %v985
        %v987 = vpop.f32.mrf.mxu0
        %v988 = vpop.f32.mrf.mxu0
        %v989 = vpop.f32.mrf.mxu0
        %990 = vdwg.mxu0
        %v992 = vsel %vm392, %v883, 0
        %v995 = vsel %vm396, %v887, 0
        %v998 = vsel %vm396, %v888, 0
        %v1001 = vsel %vm396, %v889, 0
        %1003 = vmatprep.subr.bf16.mxu0 0
        %1004 = vmatpush1.bf16.msra.mxu0 0
        %1005 = vmatprep.subr.bf16.mxu0 0
        %1006 = vmatpush1.bf16.msra.mxu0 0
        %1007 = vmatprep.subr.bf16.mxu0 0
        %1008 = vmatpush1.bf16.msra.mxu0 0
        %1009 = vmatprep.subr.bf16.mxu0 0
        %1010 = vmatpush1.bf16.msra.mxu0 0
        %1011 = vmatprep.subr.bf16.mxu0 0
        %1012 = vmatpush1.bf16.msra.mxu0 0
        %1013 = vmatprep.subr.bf16.mxu0 0
        %1014 = vmatpush1.bf16.msra.mxu0 0
        %1015 = vmatprep.subr.bf16.mxu0 %v998
        %1016 = vmatpush1.bf16.msra.mxu0 %v995
        %1017 = vmatprep.subr.bf16.mxu0 %v885
        %1018 = vmatpush1.bf16.msra.mxu0 %v884
        %1019 = vmatprep.subr.bf16.mxu0 0
        %1020 = vmatpush2.bf16.msra.mxu0 0
        %1021 = vmatprep.subr.bf16.mxu0 0
        %1022 = vmatpush2.bf16.msra.mxu0 0
        %1023 = vmatprep.subr.bf16.mxu0 0
        %1024 = vmatpush2.bf16.msra.mxu0 0
        %1025 = vmatprep.subr.bf16.mxu0 0
        %1026 = vmatpush2.bf16.msra.mxu0 0
        %1027 = vmatprep.subr.bf16.mxu0 0
        %1028 = vmatpush2.bf16.msra.mxu0 0
        %1029 = vmatprep.subr.bf16.mxu0 0
        %1030 = vmatpush2.bf16.msra.mxu0 0
        %1031 = vmatprep.subr.bf16.mxu0 0
        %1032 = vmatpush2.bf16.msra.mxu0 0
        %1033 = vmatprep.subr.bf16.mxu0 0
        %1034 = vmatpush2.bf16.msra.mxu0 0
        %1035 = vmatprep.mubr.bf16.mxu0 0
        %1036 = vmatmul.mubr.bf16.gmra.mxu0 %v992
        %v1037 = vpop.f32.mrf.mxu0
        %v1038 = vadd.f32 %v945, %v1037
        %v1039 = vpop.f32.mrf.mxu0
        %v1040 = vadd.f32 %v947, %v1039
        %v1041 = vpop.f32.mrf.mxu0
        %v1042 = vpop.f32.mrf.mxu0
        %1043 = vdwg.mxu0
        %1044 = vmatprep.subr.bf16.mxu0 0
        %1045 = vmatpush1.bf16.msra.mxu0 0
        %1046 = vmatprep.subr.bf16.mxu0 0
        %1047 = vmatpush1.bf16.msra.mxu0 0
        %1048 = vmatprep.subr.bf16.mxu0 0
        %1049 = vmatpush1.bf16.msra.mxu0 0
        %1050 = vmatprep.subr.bf16.mxu0 0
        %1051 = vmatpush1.bf16.msra.mxu0 0
        %1052 = vmatprep.subr.bf16.mxu0 0
        %1053 = vmatpush1.bf16.msra.mxu0 0
        %1054 = vmatprep.subr.bf16.mxu0 0
        %1055 = vmatpush1.bf16.msra.mxu0 0
        %1056 = vmatprep.subr.bf16.mxu0 0
        %1057 = vmatpush1.bf16.msra.mxu0 %v1001
        %1058 = vmatprep.subr.bf16.mxu0 0
        %1059 = vmatpush1.bf16.msra.mxu0 %v886
        %1060 = vmatprep.subr.bf16.mxu0 0
        %1061 = vmatpush2.bf16.msra.mxu0 0
        %1062 = vmatprep.subr.bf16.mxu0 0
        %1063 = vmatpush2.bf16.msra.mxu0 0
        %1064 = vmatprep.subr.bf16.mxu0 0
        %1065 = vmatpush2.bf16.msra.mxu0 0
        %1066 = vmatprep.subr.bf16.mxu0 0
        %1067 = vmatpush2.bf16.msra.mxu0 0
        %1068 = vmatprep.subr.bf16.mxu0 0
        %1069 = vmatpush2.bf16.msra.mxu0 0
        %1070 = vmatprep.subr.bf16.mxu0 0
        %1071 = vmatpush2.bf16.msra.mxu0 0
        %1072 = vmatprep.subr.bf16.mxu0 0
        %1073 = vmatpush2.bf16.msra.mxu0 0
        %1074 = vmatprep.subr.bf16.mxu0 0
        %1075 = vmatpush2.bf16.msra.mxu0 0
        %1076 = vmatprep.mubr.bf16.mxu0 0
        %1077 = vmatmul.mubr.bf16.gmra.mxu0 %v992
        %v1078 = vpop.f32.mrf.mxu0
        %v1079 = vadd.f32 %v986, %v1078
        %v1080 = vpop.f32.mrf.mxu0
        %v1081 = vpop.f32.mrf.mxu0
        %v1082 = vpop.f32.mrf.mxu0
        %1083 = vdwg.mxu0
        %s1084 = scalar_lea.vmem %s4, 8
        %v1085 = vld [vmem:[%s1084] sm:$0xf]
        %v1086 = vpack.c.bf16 %v877, %v874
        %v1087 = vpack.c.bf16 %v878, %v875
        %v1088 = vpack.c.bf16 %v879, %v876
        %v1089 = vpack.c.bf16 %v880, %v880
        %v1090 = vpack.c.bf16 %v881, %v881
        %v1091 = vpack.c.bf16 %v882, %v882
        %v1093 = vsel %vm392, %v1085, 0
        %v1096 = vsel %vm396, %v1089, 0
        %v1099 = vsel %vm396, %v1090, 0
        %v1102 = vsel %vm396, %v1091, 0
        %1104 = vmatprep.subr.bf16.mxu0 0
        %1105 = vmatpush1.bf16.msra.mxu0 0
        %1106 = vmatprep.subr.bf16.mxu0 0
        %1107 = vmatpush1.bf16.msra.mxu0 0
        %1108 = vmatprep.subr.bf16.mxu0 0
        %1109 = vmatpush1.bf16.msra.mxu0 0
        %1110 = vmatprep.subr.bf16.mxu0 0
        %1111 = vmatpush1.bf16.msra.mxu0 0
        %1112 = vmatprep.subr.bf16.mxu0 0
        %1113 = vmatpush1.bf16.msra.mxu0 0
        %1114 = vmatprep.subr.bf16.mxu0 0
        %1115 = vmatpush1.bf16.msra.mxu0 0
        %1116 = vmatprep.subr.bf16.mxu0 %v1099
        %1117 = vmatpush1.bf16.msra.mxu0 %v1096
        %1118 = vmatprep.subr.bf16.mxu0 %v1087
        %1119 = vmatpush1.bf16.msra.mxu0 %v1086
        %1120 = vmatprep.subr.bf16.mxu0 0
        %1121 = vmatpush2.bf16.msra.mxu0 0
        %1122 = vmatprep.subr.bf16.mxu0 0
        %1123 = vmatpush2.bf16.msra.mxu0 0
        %1124 = vmatprep.subr.bf16.mxu0 0
        %1125 = vmatpush2.bf16.msra.mxu0 0
        %1126 = vmatprep.subr.bf16.mxu0 0
        %1127 = vmatpush2.bf16.msra.mxu0 0
        %1128 = vmatprep.subr.bf16.mxu0 0
        %1129 = vmatpush2.bf16.msra.mxu0 0
        %1130 = vmatprep.subr.bf16.mxu0 0
        %1131 = vmatpush2.bf16.msra.mxu0 0
        %1132 = vmatprep.subr.bf16.mxu0 0
        %1133 = vmatpush2.bf16.msra.mxu0 0
        %1134 = vmatprep.subr.bf16.mxu0 0
        %1135 = vmatpush2.bf16.msra.mxu0 0
        %1136 = vmatprep.mubr.bf16.mxu0 0
        %1137 = vmatmul.mubr.bf16.gmra.mxu0 %v1093
        %v1138 = vpop.f32.mrf.mxu0
        %v1139 = vadd.f32 0.0, %v1138
        %v1140 = vpop.f32.mrf.mxu0
        %v1141 = vadd.f32 0.0, %v1140
        %v1142 = vpop.f32.mrf.mxu0
        %v1143 = vpop.f32.mrf.mxu0
        %1144 = vdwg.mxu0
        %1145 = vmatprep.subr.bf16.mxu0 0
        %1146 = vmatpush1.bf16.msra.mxu0 0
        %1147 = vmatprep.subr.bf16.mxu0 0
        %1148 = vmatpush1.bf16.msra.mxu0 0
        %1149 = vmatprep.subr.bf16.mxu0 0
        %1150 = vmatpush1.bf16.msra.mxu0 0
        %1151 = vmatprep.subr.bf16.mxu0 0
        %1152 = vmatpush1.bf16.msra.mxu0 0
        %1153 = vmatprep.subr.bf16.mxu0 0
        %1154 = vmatpush1.bf16.msra.mxu0 0
        %1155 = vmatprep.subr.bf16.mxu0 0
        %1156 = vmatpush1.bf16.msra.mxu0 0
        %1157 = vmatprep.subr.bf16.mxu0 0
        %1158 = vmatpush1.bf16.msra.mxu0 %v1102
        %1159 = vmatprep.subr.bf16.mxu0 0
        %1160 = vmatpush1.bf16.msra.mxu0 %v1088
        %1161 = vmatprep.subr.bf16.mxu0 0
        %1162 = vmatpush2.bf16.msra.mxu0 0
        %1163 = vmatprep.subr.bf16.mxu0 0
        %1164 = vmatpush2.bf16.msra.mxu0 0
        %1165 = vmatprep.subr.bf16.mxu0 0
        %1166 = vmatpush2.bf16.msra.mxu0 0
        %1167 = vmatprep.subr.bf16.mxu0 0
        %1168 = vmatpush2.bf16.msra.mxu0 0
        %1169 = vmatprep.subr.bf16.mxu0 0
        %1170 = vmatpush2.bf16.msra.mxu0 0
        %1171 = vmatprep.subr.bf16.mxu0 0
        %1172 = vmatpush2.bf16.msra.mxu0 0
        %1173 = vmatprep.subr.bf16.mxu0 0
        %1174 = vmatpush2.bf16.msra.mxu0 0
        %1175 = vmatprep.subr.bf16.mxu0 0
        %1176 = vmatpush2.bf16.msra.mxu0 0
        %1177 = vmatprep.mubr.bf16.mxu0 0
        %1178 = vmatmul.mubr.bf16.gmra.mxu0 %v1093
        %v1179 = vpop.f32.mrf.mxu0
        %v1180 = vadd.f32 0.0, %v1179
        %v1181 = vpop.f32.mrf.mxu0
        %v1182 = vpop.f32.mrf.mxu0
        %v1183 = vpop.f32.mrf.mxu0
        %1184 = vdwg.mxu0
        %v1185 = vadd.f32 %v1038, %v1139
        %v1186 = vadd.f32 %v1040, %v1141
        %v1187 = vadd.f32 %v1079, %v1180
        %v1188 = vld [vmem:[%s5] sm:$0xff]
        %1190 = vset.pattern.permute.xlu0 0
        %1191 = vperm.xlu0 %1190, %v1188
        %v1192 = vpop.permute.xlu0 %1191
        %v1194 = vmul.f32 %v1185, %v1192
        %v1195 = vmul.f32 %v1186, %v1192
        %v1196 = vmul.f32 %v1187, %v1192
        %v1197 = vld [vmem:[%s6] sm:$0xff]
        %1199 = vset.pattern.permute.xlu0 0
        %1200 = vperm.xlu0 %1199, %v1197
        %v1201 = vpop.permute.xlu0 %1200
        %v1203 = vadd.f32 %v1194, %v1201
        %v1204 = vadd.f32 %v1195, %v1201
        %v1205 = vadd.f32 %v1196, %v1201
        %v1206 = vadd.f32 %v1203, %v344
        %v1207 = vadd.f32 %v1204, %v341
        %v1208 = vadd.f32 %v1205, %v347
        %v1209 = vmax.f32 %v1206, 0.0
        %v1210 = vmax.f32 %v1207, 0.0
        %v1211 = vmax.f32 %v1208, 0.0
        %1212 = vst [vmem:[%s294] sm:$0xff] %v1209
        %1213 = vst [vmem:[%s294 + $0x8] sm:$0xff] %v1210
        %1214 = vst [vmem:[%s294 + $0x10] sm:$0xff] %v1211
        %s1215 = sand.u32 %s184, 1
        %s1216 = scalar_lea.sflag [#allocation4], %s1215
        %s1217 = sand.u32 %s184, 1
        %s1218 = smul.addr %s1217, 24
        %s1219 = scalar_lea.vmem [#allocation5], %s1218
        // Predicated region
        $region53: #{tpu_custom_call.1} parent=47 // pred_check
          %p1220 = pneg %p194
        $region54: #{tpu_custom_call.1} parent=47 // pred_check_branch
          %1222 = sbr.rel (%p1220) target = $region56
        $region55: #{tpu_custom_call.1} parent=47 // pred_region
          %s1224 = ssub.s32 384, 384
          %1225 = vsyncadd %s1216, %s1224
          %s1226 = smul.addr %s24, 3
          %s1227 = smul.addr %s1226, 128
          %s1228 = scalar_lea.hbm %s7, %s1227
          %s1230 = sshll.u32 %s1219, 4
          %s1231 = int_to_ptr.vmem [resolvable:$true] %s1230
          %1233 = dma.vmem_to_hbm [thread:$0]  %s1231, 384, %s1228, %s1216
        $region56: #{tpu_custom_call.1} parent=47 // pred_fallthru
          _
      $region48: #{tpu_custom_call.1} parent=5 // pred_fallthru
        _
      %p1234 = scmp.le.s32.totalorder 2, %s19
      // Predicated region
      $region57: #{tpu_custom_call.1} parent=5 // pred_check
        %p1235 = pneg %p1234
      $region58: #{tpu_custom_call.1} parent=5 // pred_check_branch
        %1237 = sbr.rel (%p1235) target = $region60
      $region59: #{tpu_custom_call.1} parent=5 // pred_region
        %s1238 = ssub.s32 %s19, 2
        // Predicated region
        $region61: #{tpu_custom_call.1} parent=59 // pred_check
          %p1239 = pneg %p200
        $region62: #{tpu_custom_call.1} parent=59 // pred_check_branch
          %1241 = sbr.rel (%p1239) target = $region64
        $region63: #{tpu_custom_call.1} parent=59 // pred_region
          %s1242 = sand.u32 %s185, 1
          %s1243 = scalar_lea.sflag [#allocation4], %s1242
          %s1244 = sand.u32 %s185, 1
          %s1245 = smul.addr %s1244, 24
          %s1246 = scalar_lea.vmem [#allocation5], %s1245
          %1247 = dma.done %s1243, 384
        $region64: #{tpu_custom_call.1} parent=59 // pred_fallthru
          _
      $region60: #{tpu_custom_call.1} parent=5 // pred_fallthru
        _
    $region6: #{tpu_custom_call.1} parent=1 // loop_footer
      %s23 = sadd.s32 1, %s19
    $region7: #{tpu_custom_call.1} parent=1 // loop_footer_branch
      %18 = sbr.rel target = $region3
    $region8: #{tpu_custom_call.1} parent=1 // loop_exit
      _
    %1248 = vsyncpa [#allocation3], 1
    %s1249 = scalar_lea.sflag [#allocation3], 1
    %1250 = vsyncpa %s1249, 1
    %1251 = vsyncpa [#allocation4], 1
    %s1252 = scalar_lea.sflag [#allocation4], 1
    %1253 = vsyncpa %s1252, 1

</llo_original>
